<compile_context>
chip_gen: v7x
topology: tpu7x:2x2x1
jax: 0.10.0
libtpu: 0.0.40
codegen_flags: <defaults>
</compile_context>

<pallas_src>
import functools

import jax
import jax.numpy as jnp
from jax.experimental import pallas as pl
from jax.experimental.pallas import tpu as pltpu

_LANE = 128


def _round_up(x, m):
    return ((x + m - 1) // m) * m


def _cdiv(a, b):
    return -(-a // b)


def _sublane(dtype):
    # second-to-last-dim packing: 8 rows for 4-byte dtypes, 16 for 2-byte.
    return 8 * (4 // jnp.dtype(dtype).itemsize)


def _vmem_budget_bytes():
    """Generation-aware VMEM budget with headroom (v7x: 64 MiB/TC, v5e/v6e: 128 MiB)."""
    try:
        cap = int(pltpu.get_tpu_info().vmem_capacity_bytes)
    except Exception:
        cap = 64 * 1024 * 1024          # conservative default (v7x per-TC)
    return int(cap * 0.80)


def pad_params(weights, biases):
    """Zero-pad the first-layer fan_in and every fan_out up to multiples of 128.

    Exact: padded units get zero weight columns + zero bias, stay zero through
    ReLU, and hit zero rows of the next weight.  Call ONCE (not per forward).
    """
    padded_w, padded_b = [], []
    prev = _round_up(weights[0].shape[0], _LANE)
    for w, b in zip(weights, biases):
        fan_in, fan_out = w.shape
        out_p = _round_up(fan_out, _LANE)
        w_p = jnp.zeros((prev, out_p), w.dtype).at[:fan_in, :fan_out].set(w)
        b_p = jnp.zeros((1, out_p), b.dtype).at[:, :fan_out].set(
            jnp.reshape(b, (1, fan_out)))
        padded_w.append(w_p)
        padded_b.append(b_p)
        prev = out_p
    return padded_w, padded_b


# ----------------------------- fused kernel ---------------------------------

def _fused_mlp_kernel(num_layers, x_ref, *refs):
    """refs = (w0, b0, ..., w_{L-1}, b_{L-1}, out_ref); one batch tile per step."""
    out_ref = refs[-1]
    mxu_dtype = refs[0].dtype                     # weight storage dtype feeds the MXU
    h = x_ref[...].astype(mxu_dtype)
    for i in range(num_layers):
        w = refs[2 * i][...]
        b = refs[2 * i + 1][...]
        acc = jnp.dot(h, w, preferred_element_type=jnp.float32)   # MXU, f32 accumulate
        acc = acc + b.astype(jnp.float32)                         # VPU stays f32 (v5e-safe)
        if i < num_layers - 1:
            h = jnp.maximum(acc, 0.0).astype(mxu_dtype)
        else:
            h = acc
    out_ref[...] = h.astype(out_ref.dtype)


# ------------------------ layer-wise fallback kernel ------------------------

def _pick_tile(dim, cap):
    """Largest multiple of 128 that divides `dim` (a multiple of 128) and is <= cap."""
    best = _LANE
    t = _LANE
    while t <= min(dim, cap):
        if dim % t == 0:
            best = t
        t += _LANE
    return best


def _linear_kernel(apply_relu, x_ref, w_ref, b_ref, o_ref, acc_ref):
    k = pl.program_id(2)

    @pl.when(k == 0)
    def _():
        acc_ref[...] = jnp.zeros_like(acc_ref)

    acc_ref[...] += jnp.dot(x_ref[...].astype(w_ref.dtype), w_ref[...],
                            preferred_element_type=jnp.float32)

    @pl.when(k == pl.num_programs(2) - 1)
    def _():
        y = acc_ref[...] + b_ref[...].astype(jnp.float32)
        if apply_relu:
            y = jnp.maximum(y, 0.0)
        o_ref[...] = y.astype(o_ref.dtype)


def _linear_layer(x, w, b, *, apply_relu, out_dtype, tm, vmem_budget):
    m, kp = x.shape
    _, np_ = w.shape
    tn = _pick_tile(np_, 512)
    tk = _pick_tile(kp, 512)
    return pl.pallas_call(
        functools.partial(_linear_kernel, apply_relu),
        out_shape=jax.ShapeDtypeStruct((m, np_), out_dtype),
        grid=(m // tm, np_ // tn, kp // tk),
        in_specs=[pl.BlockSpec((tm, tk), lambda i, j, k: (i, k)),
                  pl.BlockSpec((tk, tn), lambda i, j, k: (k, j)),
                  pl.BlockSpec((1, tn), lambda i, j, k: (0, j))],
        out_specs=pl.BlockSpec((tm, tn), lambda i, j, k: (i, j)),
        scratch_shapes=[pltpu.VMEM((tm, tn), jnp.float32)],
        compiler_params=pltpu.CompilerParams(
            dimension_semantics=("parallel", "parallel", "arbitrary"),
            vmem_limit_bytes=vmem_budget),
    )(x, w, b)


# ------------------------------- forward ------------------------------------

def _mlp_forward(x, pw, pb, out_dim, *, block_batch=None, force_layerwise=False):
    num_layers = len(pw)
    batch, in_dim = x.shape
    in_pad = pw[0].shape[0]
    out_pad = pw[-1].shape[1]

    vmem_budget = _vmem_budget_bytes()
    x_item = jnp.dtype(x.dtype).itemsize
    param_bytes = sum(int(a.size) * a.dtype.itemsize for a in pw + pb)
    widest = max([in_pad] + [w.shape[1] for w in pw])

    def fused_fits(tb_):
        act = 3 * tb_ * widest * 4                          # f32 temporaries
        io = 2 * tb_ * (in_pad + out_pad) * x_item          # double-buffered x / out tiles
        return param_bytes + act + io <= vmem_budget

    sub = max(_sublane(x.dtype), _sublane(pw[0].dtype))
    if block_batch is None:
        block_batch = 1024                                  # larger default tile (was 256)
    tb0 = _round_up(min(block_batch, _round_up(batch, sub)), sub)
    if _round_up(batch, sub) >= 2 * sub:                    # >= 2 grid steps -> both v7x TCs busy
        tb0 = min(tb0, _round_up(_cdiv(batch, 2), sub))

    tb = tb0
    while tb > sub and not fused_fits(tb):
        tb = max(sub, _round_up(tb // 2, sub))

    def pad_x(tb_):
        bp = _round_up(batch, tb_)
        return jnp.pad(x, ((0, bp - batch), (0, in_pad - in_dim))), bp

    # ---------------- fused, weight-resident path ----------------
    if not force_layerwise and fused_fits(tb):
        xp, b_pad = pad_x(tb)
        flops = 2 * b_pad * sum(w.shape[0] * w.shape[1] for w in pw)
        bytes_acc = b_pad * (in_pad + out_pad) * x_item + param_bytes
        cost = pl.CostEstimate(flops=int(flops), transcendentals=0,
                               bytes_accessed=int(bytes_acc))

        def call_fused(weight_mode):
            in_specs = [pl.BlockSpec((tb, in_pad), lambda i: (i, 0))]
            args = [xp]
            for w, b in zip(pw, pb):
                # Full-array blocks, constant index map -> fetched once, resident.
                in_specs.append(pl.BlockSpec(w.shape, lambda i: (0, 0),
                                             pipeline_mode=weight_mode))
                in_specs.append(pl.BlockSpec(b.shape, lambda i: (0, 0),
                                             pipeline_mode=weight_mode))
                args += [w, b]
            return pl.pallas_call(
                functools.partial(_fused_mlp_kernel, num_layers),
                out_shape=jax.ShapeDtypeStruct((b_pad, out_pad), x.dtype),
                grid=(b_pad // tb,),
                in_specs=in_specs,
                out_specs=pl.BlockSpec((tb, out_pad), lambda i: (i, 0)),
                compiler_params=pltpu.CompilerParams(
                    dimension_semantics=("parallel",),
                    vmem_limit_bytes=vmem_budget),
                cost_estimate=cost,
            )(*args)

        # Buffered(1): constant-index blocks need no double buffer -> single
        # resident copy of the params.  Fall back to default pipelining and
        # finally to the layer-wise path if the compiler rejects anything.
        modes = [None]
        if hasattr(pl, "Buffered"):
            modes.insert(0, pl.Buffered(1))
        for mode in modes:
            try:
                return call_fused(mode)[:batch, :out_dim]
            except Exception:
                continue

    # ---------------- layer-wise tiled fallback (params too big, etc.) -------
    xp, _ = pad_x(tb0)
    h = xp
    for i, (w, b) in enumerate(zip(pw, pb)):
        last = i == num_layers - 1
        h = _linear_layer(h, w, b,
                          apply_relu=not last,
                          out_dtype=x.dtype if last else w.dtype,
                          tm=tb0, vmem_budget=vmem_budget)
    return h[:batch, :out_dim]


def make_mlp(weights, biases, *, block_batch=None, force_layerwise=False):
    """Pad parameters once and return forward(x) for x of shape [batch, input_size]."""
    assert len(weights) == len(biases) and len(weights) >= 1
    pw, pb = pad_params(weights, biases)
    out_dim = weights[-1].shape[1]

    def forward(x):
        return _mlp_forward(x, pw, pb, out_dim,
                            block_batch=block_batch,
                            force_layerwise=force_layerwise)

    return forward


# ------------------------------- utilities ----------------------------------

def init_params(key, input_size, layer_sizes, output_size, dtype=jnp.float32):
    """Parameter init matching nn.Linear shapes (stored as [in, out])."""
    dims = [input_size] + list(layer_sizes) + [output_size]
    weights, biases = [], []
    for fan_in, fan_out in zip(dims[:-1], dims[1:]):
        key, wk, bk = jax.random.split(key, 3)
        bound = float(fan_in) ** -0.5           # same scale as PyTorch's default init
        weights.append(jax.random.uniform(wk, (fan_in, fan_out), dtype, -bound, bound))
        biases.append(jax.random.uniform(bk, (1, fan_out), dtype, -bound, bound))
    return weights, biases


def reference_forward(x, weights, biases):
    """Pure-JAX reference with the same dtype discipline as the kernels
    (MXU operands in the weight dtype, f32 accumulation / bias / ReLU)."""
    h = x
    for i, (w, b) in enumerate(zip(weights, biases)):
        h = jnp.dot(h.astype(w.dtype), w, preferred_element_type=jnp.float32)
        h = h + b.astype(jnp.float32)
        if i < len(weights) - 1:
            h = jnp.maximum(h, 0.0)
    return h


if __name__ == "__main__":
    input_size = 16
    layer_sizes = [32, 32]
    output_size = 8
    batch = 20                                   # deliberately not tile-aligned

    key = jax.random.PRNGKey(0)
    key, xk = jax.random.split(key)
    x = jax.random.normal(xk, (batch, input_size), jnp.float32)

    weights, biases = init_params(key, input_size, layer_sizes, output_size,
                                  dtype=jnp.float32)
    # bf16 parameter storage: native MXU fast path on every generation, halves
    # resident-weight VMEM and parameter DMA.  Accumulation stays f32.
    w_bf16 = [w.astype(jnp.bfloat16) for w in weights]
    b_bf16 = [b.astype(jnp.bfloat16) for b in biases]

    ref = reference_forward(x, w_bf16, b_bf16)

    # Fused, weight-resident path (params padded once at build time).
    forward = make_mlp(w_bf16, b_bf16)
    out = jax.block_until_ready(forward(x))
    assert out.shape == (batch, output_size)
    assert jnp.allclose(out, ref, atol=1e-3, rtol=1e-3), "fused kernel mismatch"

    # Layer-wise tiled fallback (used automatically when params exceed the
    # per-TC VMEM budget); exercised explicitly here for coverage.
    out_lw = jax.block_until_ready(make_mlp(w_bf16, b_bf16, force_layerwise=True)(x))
    assert jnp.allclose(out_lw, ref, atol=1e-3, rtol=1e-3), "layer-wise kernel mismatch"

    print("KERNEL_OK")
</pallas_src>

<mosaic_0001>
module attributes {stable_mosaic.version = 11 : i64} {
  func.func @_fused_mlp_kernel(%arg0: i32, %arg1: memref<16x128xf32, #tpu.memory_space<vmem>>, %arg2: memref<128x128xbf16, #tpu.memory_space<vmem>>, %arg3: memref<1x128xbf16, #tpu.memory_space<vmem>>, %arg4: memref<128x128xbf16, #tpu.memory_space<vmem>>, %arg5: memref<1x128xbf16, #tpu.memory_space<vmem>>, %arg6: memref<128x128xbf16, #tpu.memory_space<vmem>>, %arg7: memref<1x128xbf16, #tpu.memory_space<vmem>>, %arg8: memref<16x128xf32, #tpu.memory_space<vmem>>) attributes {dimension_semantics = [#tpu.dimension_semantics<parallel>], iteration_bounds = array<i64: 2>, scalar_prefetch = 0 : i64, scratch_operands = 0 : i64, tpu.core_type = #tpu.core_type<tc>, window_params = [{transform_indices = @transform_0, window_bounds = array<i64: 16, 128>}, {pipeline_mode = #tpu.pipeline_mode<synchronous>, transform_indices = @transform_1, window_bounds = array<i64: 128, 128>}, {pipeline_mode = #tpu.pipeline_mode<synchronous>, transform_indices = @transform_2, window_bounds = array<i64: 1, 128>}, {pipeline_mode = #tpu.pipeline_mode<synchronous>, transform_indices = @transform_3, window_bounds = array<i64: 128, 128>}, {pipeline_mode = #tpu.pipeline_mode<synchronous>, transform_indices = @transform_4, window_bounds = array<i64: 1, 128>}, {pipeline_mode = #tpu.pipeline_mode<synchronous>, transform_indices = @transform_5, window_bounds = array<i64: 128, 128>}, {pipeline_mode = #tpu.pipeline_mode<synchronous>, transform_indices = @transform_6, window_bounds = array<i64: 1, 128>}, {transform_indices = @transform_7, window_bounds = array<i64: 16, 128>}]} {
    %c0 = arith.constant 0 : index
    %c0_0 = arith.constant 0 : index
    %0 = vector.load %arg1[%c0, %c0_0] : memref<16x128xf32, #tpu.memory_space<vmem>>, vector<16x128xf32>
    %1 = arith.truncf %0 : vector<16x128xf32> to vector<16x128xbf16>
    %c0_1 = arith.constant 0 : index
    %c0_2 = arith.constant 0 : index
    %2 = vector.load %arg2[%c0_1, %c0_2] : memref<128x128xbf16, #tpu.memory_space<vmem>>, vector<128x128xbf16>
    %c0_3 = arith.constant 0 : index
    %c0_4 = arith.constant 0 : index
    %3 = vector.load %arg3[%c0_3, %c0_4] : memref<1x128xbf16, #tpu.memory_space<vmem>>, vector<1x128xbf16>
    %cst = arith.constant dense<0.000000e+00> : vector<16x128xf32>
    %4 = tpu.matmul %1, %2, %cst {dimension_numbers = #tpu.dot_dimension_numbers<[1], [0], [0], [1], [0, 0, 1, 1], [], []>} : vector<16x128xbf16>, vector<128x128xbf16>, vector<16x128xf32> -> vector<16x128xf32>
    %5 = arith.extf %3 : vector<1x128xbf16> to vector<1x128xf32>
    %6 = vector.broadcast %5 : vector<1x128xf32> to vector<16x128xf32>
    %7 = arith.addf %4, %6 : vector<16x128xf32>
    %cst_5 = arith.constant 0.000000e+00 : f32
    %8 = vector.broadcast %cst_5 : f32 to vector<16x128xf32>
    %9 = arith.maximumf %7, %8 : vector<16x128xf32>
    %10 = arith.truncf %9 : vector<16x128xf32> to vector<16x128xbf16>
    %c0_6 = arith.constant 0 : index
    %c0_7 = arith.constant 0 : index
    %11 = vector.load %arg4[%c0_6, %c0_7] : memref<128x128xbf16, #tpu.memory_space<vmem>>, vector<128x128xbf16>
    %c0_8 = arith.constant 0 : index
    %c0_9 = arith.constant 0 : index
    %12 = vector.load %arg5[%c0_8, %c0_9] : memref<1x128xbf16, #tpu.memory_space<vmem>>, vector<1x128xbf16>
    %cst_10 = arith.constant dense<0.000000e+00> : vector<16x128xf32>
    %13 = tpu.matmul %10, %11, %cst_10 {dimension_numbers = #tpu.dot_dimension_numbers<[1], [0], [0], [1], [0, 0, 1, 1], [], []>} : vector<16x128xbf16>, vector<128x128xbf16>, vector<16x128xf32> -> vector<16x128xf32>
    %14 = arith.extf %12 : vector<1x128xbf16> to vector<1x128xf32>
    %15 = vector.broadcast %14 : vector<1x128xf32> to vector<16x128xf32>
    %16 = arith.addf %13, %15 : vector<16x128xf32>
    %cst_11 = arith.constant 0.000000e+00 : f32
    %17 = vector.broadcast %cst_11 : f32 to vector<16x128xf32>
    %18 = arith.maximumf %16, %17 : vector<16x128xf32>
    %19 = arith.truncf %18 : vector<16x128xf32> to vector<16x128xbf16>
    %c0_12 = arith.constant 0 : index
    %c0_13 = arith.constant 0 : index
    %20 = vector.load %arg6[%c0_12, %c0_13] : memref<128x128xbf16, #tpu.memory_space<vmem>>, vector<128x128xbf16>
    %c0_14 = arith.constant 0 : index
    %c0_15 = arith.constant 0 : index
    %21 = vector.load %arg7[%c0_14, %c0_15] : memref<1x128xbf16, #tpu.memory_space<vmem>>, vector<1x128xbf16>
    %cst_16 = arith.constant dense<0.000000e+00> : vector<16x128xf32>
    %22 = tpu.matmul %19, %20, %cst_16 {dimension_numbers = #tpu.dot_dimension_numbers<[1], [0], [0], [1], [0, 0, 1, 1], [], []>} : vector<16x128xbf16>, vector<128x128xbf16>, vector<16x128xf32> -> vector<16x128xf32>
    %23 = arith.extf %21 : vector<1x128xbf16> to vector<1x128xf32>
    %24 = vector.broadcast %23 : vector<1x128xf32> to vector<16x128xf32>
    %25 = arith.addf %22, %24 : vector<16x128xf32>
    %c0_17 = arith.constant 0 : index
    %c0_18 = arith.constant 0 : index
    %26 = vector.load %arg8[%c0_17, %c0_18] : memref<16x128xf32, #tpu.memory_space<vmem>>, vector<16x128xf32>
    tpu.vector_store %arg8[%c0_17, %c0_18], %25 {strides = array<i32>} : memref<16x128xf32, #tpu.memory_space<vmem>>, vector<16x128xf32>,
    return
  }
  func.func @transform_0(%arg0: i32) -> (i32, i32) {
    %c0_i32 = arith.constant 0 : i32
    %c0_i32_0 = arith.constant 0 : i32
    return %arg0, %c0_i32 : i32, i32
  }
  func.func @transform_1(%arg0: i32) -> (i32, i32) {
    %c0_i32 = arith.constant 0 : i32
    %c0_i32_0 = arith.constant 0 : i32
    %c0_i32_1 = arith.constant 0 : i32
    return %c0_i32, %c0_i32_0 : i32, i32
  }
  func.func @transform_2(%arg0: i32) -> (i32, i32) {
    %c0_i32 = arith.constant 0 : i32
    %c0_i32_0 = arith.constant 0 : i32
    %c0_i32_1 = arith.constant 0 : i32
    return %c0_i32, %c0_i32_0 : i32, i32
  }
  func.func @transform_3(%arg0: i32) -> (i32, i32) {
    %c0_i32 = arith.constant 0 : i32
    %c0_i32_0 = arith.constant 0 : i32
    %c0_i32_1 = arith.constant 0 : i32
    return %c0_i32, %c0_i32_0 : i32, i32
  }
  func.func @transform_4(%arg0: i32) -> (i32, i32) {
    %c0_i32 = arith.constant 0 : i32
    %c0_i32_0 = arith.constant 0 : i32
    %c0_i32_1 = arith.constant 0 : i32
    return %c0_i32, %c0_i32_0 : i32, i32
  }
  func.func @transform_5(%arg0: i32) -> (i32, i32) {
    %c0_i32 = arith.constant 0 : i32
    %c0_i32_0 = arith.constant 0 : i32
    %c0_i32_1 = arith.constant 0 : i32
    return %c0_i32, %c0_i32_0 : i32, i32
  }
  func.func @transform_6(%arg0: i32) -> (i32, i32) {
    %c0_i32 = arith.constant 0 : i32
    %c0_i32_0 = arith.constant 0 : i32
    %c0_i32_1 = arith.constant 0 : i32
    return %c0_i32, %c0_i32_0 : i32, i32
  }
  func.func @transform_7(%arg0: i32) -> (i32, i32) {
    %c0_i32 = arith.constant 0 : i32
    %c0_i32_0 = arith.constant 0 : i32
    return %arg0, %c0_i32 : i32, i32
  }
}

module attributes {stable_mosaic.version = 11 : i64} {
  func.func @_fused_mlp_kernel(%arg0: i32, %arg1: memref<16x128xf32, #tpu.memory_space<vmem>>, %arg2: memref<128x128xbf16, #tpu.memory_space<vmem>>, %arg3: memref<1x128xbf16, #tpu.memory_space<vmem>>, %arg4: memref<128x128xbf16, #tpu.memory_space<vmem>>, %arg5: memref<1x128xbf16, #tpu.memory_space<vmem>>, %arg6: memref<128x128xbf16, #tpu.memory_space<vmem>>, %arg7: memref<1x128xbf16, #tpu.memory_space<vmem>>, %arg8: memref<16x128xf32, #tpu.memory_space<vmem>>) attributes {dimension_semantics = [#tpu.dimension_semantics<parallel>], iteration_bounds = array<i64: 2>, scalar_prefetch = 0 : i64, scratch_operands = 0 : i64, tpu.core_type = #tpu.core_type<tc>, window_params = [{transform_indices = @transform_0, window_bounds = array<i64: 16, 128>}, {pipeline_mode = #tpu.pipeline_mode<synchronous>, transform_indices = @transform_1, window_bounds = array<i64: 128, 128>}, {pipeline_mode = #tpu.pipeline_mode<synchronous>, transform_indices = @transform_2, window_bounds = array<i64: 1, 128>}, {pipeline_mode = #tpu.pipeline_mode<synchronous>, transform_indices = @transform_3, window_bounds = array<i64: 128, 128>}, {pipeline_mode = #tpu.pipeline_mode<synchronous>, transform_indices = @transform_4, window_bounds = array<i64: 1, 128>}, {pipeline_mode = #tpu.pipeline_mode<synchronous>, transform_indices = @transform_5, window_bounds = array<i64: 128, 128>}, {pipeline_mode = #tpu.pipeline_mode<synchronous>, transform_indices = @transform_6, window_bounds = array<i64: 1, 128>}, {transform_indices = @transform_7, window_bounds = array<i64: 16, 128>}]} {
    %c0 = arith.constant 0 : index
    %c0_0 = arith.constant 0 : index
    %0 = vector.load %arg1[%c0, %c0_0] : memref<16x128xf32, #tpu.memory_space<vmem>>, vector<16x128xf32>
    %1 = arith.truncf %0 : vector<16x128xf32> to vector<16x128xbf16>
    %c0_1 = arith.constant 0 : index
    %c0_2 = arith.constant 0 : index
    %2 = vector.load %arg2[%c0_1, %c0_2] : memref<128x128xbf16, #tpu.memory_space<vmem>>, vector<128x128xbf16>
    %c0_3 = arith.constant 0 : index
    %c0_4 = arith.constant 0 : index
    %3 = vector.load %arg3[%c0_3, %c0_4] : memref<1x128xbf16, #tpu.memory_space<vmem>>, vector<1x128xbf16>
    %cst = arith.constant dense<0.000000e+00> : vector<16x128xf32>
    %4 = tpu.matmul %1, %2, %cst {dimension_numbers = #tpu.dot_dimension_numbers<[1], [0], [0], [1], [0, 0, 1, 1], [], []>} : vector<16x128xbf16>, vector<128x128xbf16>, vector<16x128xf32> -> vector<16x128xf32>
    %5 = arith.extf %3 : vector<1x128xbf16> to vector<1x128xf32>
    %6 = vector.broadcast %5 : vector<1x128xf32> to vector<16x128xf32>
    %7 = arith.addf %4, %6 : vector<16x128xf32>
    %cst_5 = arith.constant 0.000000e+00 : f32
    %8 = vector.broadcast %cst_5 : f32 to vector<16x128xf32>
    %9 = arith.maximumf %7, %8 : vector<16x128xf32>
    %10 = arith.truncf %9 : vector<16x128xf32> to vector<16x128xbf16>
    %c0_6 = arith.constant 0 : index
    %c0_7 = arith.constant 0 : index
    %11 = vector.load %arg4[%c0_6, %c0_7] : memref<128x128xbf16, #tpu.memory_space<vmem>>, vector<128x128xbf16>
    %c0_8 = arith.constant 0 : index
    %c0_9 = arith.constant 0 : index
    %12 = vector.load %arg5[%c0_8, %c0_9] : memref<1x128xbf16, #tpu.memory_space<vmem>>, vector<1x128xbf16>
    %cst_10 = arith.constant dense<0.000000e+00> : vector<16x128xf32>
    %13 = tpu.matmul %10, %11, %cst_10 {dimension_numbers = #tpu.dot_dimension_numbers<[1], [0], [0], [1], [0, 0, 1, 1], [], []>} : vector<16x128xbf16>, vector<128x128xbf16>, vector<16x128xf32> -> vector<16x128xf32>
    %14 = arith.extf %12 : vector<1x128xbf16> to vector<1x128xf32>
    %15 = vector.broadcast %14 : vector<1x128xf32> to vector<16x128xf32>
    %16 = arith.addf %13, %15 : vector<16x128xf32>
    %cst_11 = arith.constant 0.000000e+00 : f32
    %17 = vector.broadcast %cst_11 : f32 to vector<16x128xf32>
    %18 = arith.maximumf %16, %17 : vector<16x128xf32>
    %19 = arith.truncf %18 : vector<16x128xf32> to vector<16x128xbf16>
    %c0_12 = arith.constant 0 : index
    %c0_13 = arith.constant 0 : index
    %20 = vector.load %arg6[%c0_12, %c0_13] : memref<128x128xbf16, #tpu.memory_space<vmem>>, vector<128x128xbf16>
    %c0_14 = arith.constant 0 : index
    %c0_15 = arith.constant 0 : index
    %21 = vector.load %arg7[%c0_14, %c0_15] : memref<1x128xbf16, #tpu.memory_space<vmem>>, vector<1x128xbf16>
    %cst_16 = arith.constant dense<0.000000e+00> : vector<16x128xf32>
    %22 = tpu.matmul %19, %20, %cst_16 {dimension_numbers = #tpu.dot_dimension_numbers<[1], [0], [0], [1], [0, 0, 1, 1], [], []>} : vector<16x128xbf16>, vector<128x128xbf16>, vector<16x128xf32> -> vector<16x128xf32>
    %23 = arith.extf %21 : vector<1x128xbf16> to vector<1x128xf32>
    %24 = vector.broadcast %23 : vector<1x128xf32> to vector<16x128xf32>
    %25 = arith.addf %22, %24 : vector<16x128xf32>
    %c0_17 = arith.constant 0 : index
    %c0_18 = arith.constant 0 : index
    %26 = vector.load %arg8[%c0_17, %c0_18] : memref<16x128xf32, #tpu.memory_space<vmem>>, vector<16x128xf32>
    tpu.vector_store %arg8[%c0_17, %c0_18], %25 {strides = array<i32>} : memref<16x128xf32, #tpu.memory_space<vmem>>, vector<16x128xf32>,
    return
  }
  func.func @transform_0(%arg0: i32) -> (i32, i32) {
    %c0_i32 = arith.constant 0 : i32
    %c0_i32_0 = arith.constant 0 : i32
    return %arg0, %c0_i32 : i32, i32
  }
  func.func @transform_1(%arg0: i32) -> (i32, i32) {
    %c0_i32 = arith.constant 0 : i32
    %c0_i32_0 = arith.constant 0 : i32
    %c0_i32_1 = arith.constant 0 : i32
    return %c0_i32, %c0_i32_0 : i32, i32
  }
  func.func @transform_2(%arg0: i32) -> (i32, i32) {
    %c0_i32 = arith.constant 0 : i32
    %c0_i32_0 = arith.constant 0 : i32
    %c0_i32_1 = arith.constant 0 : i32
    return %c0_i32, %c0_i32_0 : i32, i32
  }
  func.func @transform_3(%arg0: i32) -> (i32, i32) {
    %c0_i32 = arith.constant 0 : i32
    %c0_i32_0 = arith.constant 0 : i32
    %c0_i32_1 = arith.constant 0 : i32
    return %c0_i32, %c0_i32_0 : i32, i32
  }
  func.func @transform_4(%arg0: i32) -> (i32, i32) {
    %c0_i32 = arith.constant 0 : i32
    %c0_i32_0 = arith.constant 0 : i32
    %c0_i32_1 = arith.constant 0 : i32
    return %c0_i32, %c0_i32_0 : i32, i32
  }
  func.func @transform_5(%arg0: i32) -> (i32, i32) {
    %c0_i32 = arith.constant 0 : i32
    %c0_i32_0 = arith.constant 0 : i32
    %c0_i32_1 = arith.constant 0 : i32
    return %c0_i32, %c0_i32_0 : i32, i32
  }
  func.func @transform_6(%arg0: i32) -> (i32, i32) {
    %c0_i32 = arith.constant 0 : i32
    %c0_i32_0 = arith.constant 0 : i32
    %c0_i32_1 = arith.constant 0 : i32
    return %c0_i32, %c0_i32_0 : i32, i32
  }
  func.func @transform_7(%arg0: i32) -> (i32, i32) {
    %c0_i32 = arith.constant 0 : i32
    %c0_i32_0 = arith.constant 0 : i32
    return %arg0, %c0_i32 : i32, i32
  }
}

module attributes {stable_mosaic.version = 11 : i64} {
  func.func @_linear_kernel(%arg0: i32, %arg1: i32, %arg2: i32, %arg3: memref<16x128xf32, #tpu.memory_space<vmem>>, %arg4: memref<128x128xbf16, #tpu.memory_space<vmem>>, %arg5: memref<1x128xbf16, #tpu.memory_space<vmem>>, %arg6: memref<16x128xbf16, #tpu.memory_space<vmem>>, %arg7: memref<16x128xf32, #tpu.memory_space<vmem>>) attributes {dimension_semantics = [#tpu.dimension_semantics<parallel>, #tpu.dimension_semantics<parallel>, #tpu.dimension_semantics<arbitrary>], iteration_bounds = array<i64: 2, 1, 1>, scalar_prefetch = 0 : i64, scratch_operands = 1 : i64, tpu.core_type = #tpu.core_type<tc>, window_params = [{transform_indices = @transform_0, window_bounds = array<i64: 16, 128>}, {transform_indices = @transform_1, window_bounds = array<i64: 128, 128>}, {transform_indices = @transform_2, window_bounds = array<i64: 1, 128>}, {transform_indices = @transform_3, window_bounds = array<i64: 16, 128>}]} {
    %c0_i32 = arith.constant 0 : i32
    %0 = arith.cmpi eq, %arg2, %c0_i32 : i32
    %1 = arith.extui %0 : i1 to i32
    %c0_i32_0 = arith.constant 0 : i32
    %2 = arith.cmpi ne, %1, %c0_i32_0 : i32
    scf.if %2 {
      %cst_10 = arith.constant 0.000000e+00 : f32
      %13 = vector.broadcast %cst_10 : f32 to vector<16x128xf32>
      %c0_11 = arith.constant 0 : index
      %c0_12 = arith.constant 0 : index
      %14 = vector.load %arg7[%c0_11, %c0_12] : memref<16x128xf32, #tpu.memory_space<vmem>>, vector<16x128xf32>
      tpu.vector_store %arg7[%c0_11, %c0_12], %13 {strides = array<i32>} : memref<16x128xf32, #tpu.memory_space<vmem>>, vector<16x128xf32>,
    } else {
    }
    %c0 = arith.constant 0 : index
    %c0_1 = arith.constant 0 : index
    %3 = vector.load %arg7[%c0, %c0_1] : memref<16x128xf32, #tpu.memory_space<vmem>>, vector<16x128xf32>
    %c0_2 = arith.constant 0 : index
    %c0_3 = arith.constant 0 : index
    %4 = vector.load %arg3[%c0_2, %c0_3] : memref<16x128xf32, #tpu.memory_space<vmem>>, vector<16x128xf32>
    %5 = arith.truncf %4 : vector<16x128xf32> to vector<16x128xbf16>
    %c0_4 = arith.constant 0 : index
    %c0_5 = arith.constant 0 : index
    %6 = vector.load %arg4[%c0_4, %c0_5] : memref<128x128xbf16, #tpu.memory_space<vmem>>, vector<128x128xbf16>
    %cst = arith.constant dense<0.000000e+00> : vector<16x128xf32>
    %7 = tpu.matmul %5, %6, %cst {dimension_numbers = #tpu.dot_dimension_numbers<[1], [0], [0], [1], [0, 0, 1, 1], [], []>} : vector<16x128xbf16>, vector<128x128xbf16>, vector<16x128xf32> -> vector<16x128xf32>
    %8 = arith.addf %3, %7 : vector<16x128xf32>
    %c0_6 = arith.constant 0 : index
    %c0_7 = arith.constant 0 : index
    %9 = vector.load %arg7[%c0_6, %c0_7] : memref<16x128xf32, #tpu.memory_space<vmem>>, vector<16x128xf32>
    tpu.vector_store %arg7[%c0_6, %c0_7], %8 {strides = array<i32>} : memref<16x128xf32, #tpu.memory_space<vmem>>, vector<16x128xf32>,
    %c0_i32_8 = arith.constant 0 : i32
    %10 = arith.cmpi eq, %arg2, %c0_i32_8 : i32
    %11 = arith.extui %10 : i1 to i32
    %c0_i32_9 = arith.constant 0 : i32
    %12 = arith.cmpi ne, %11, %c0_i32_9 : i32
    scf.if %12 {
      %c0_10 = arith.constant 0 : index
      %c0_11 = arith.constant 0 : index
      %13 = vector.load %arg7[%c0_10, %c0_11] : memref<16x128xf32, #tpu.memory_space<vmem>>, vector<16x128xf32>
      %c0_12 = arith.constant 0 : index
      %c0_13 = arith.constant 0 : index
      %14 = vector.load %arg5[%c0_12, %c0_13] : memref<1x128xbf16, #tpu.memory_space<vmem>>, vector<1x128xbf16>
      %15 = arith.extf %14 : vector<1x128xbf16> to vector<1x128xf32>
      %16 = vector.broadcast %15 : vector<1x128xf32> to vector<16x128xf32>
      %17 = arith.addf %13, %16 : vector<16x128xf32>
      %cst_14 = arith.constant 0.000000e+00 : f32
      %18 = vector.broadcast %cst_14 : f32 to vector<16x128xf32>
      %19 = arith.maximumf %17, %18 : vector<16x128xf32>
      %20 = arith.truncf %19 : vector<16x128xf32> to vector<16x128xbf16>
      %c0_15 = arith.constant 0 : index
      %c0_16 = arith.constant 0 : index
      %21 = vector.load %arg6[%c0_15, %c0_16] : memref<16x128xbf16, #tpu.memory_space<vmem>>, vector<16x128xbf16>
      tpu.vector_store %arg6[%c0_15, %c0_16], %20 {strides = array<i32>} : memref<16x128xbf16, #tpu.memory_space<vmem>>, vector<16x128xbf16>,
    } else {
    }
    return
  }
  func.func @transform_0(%arg0: i32, %arg1: i32, %arg2: i32) -> (i32, i32) {
    %c0_i32 = arith.constant 0 : i32
    return %arg0, %arg2 : i32, i32
  }
  func.func @transform_1(%arg0: i32, %arg1: i32, %arg2: i32) -> (i32, i32) {
    %c0_i32 = arith.constant 0 : i32
    return %arg2, %arg1 : i32, i32
  }
  func.func @transform_2(%arg0: i32, %arg1: i32, %arg2: i32) -> (i32, i32) {
    %c0_i32 = arith.constant 0 : i32
    %c0_i32_0 = arith.constant 0 : i32
    return %c0_i32, %arg1 : i32, i32
  }
  func.func @transform_3(%arg0: i32, %arg1: i32, %arg2: i32) -> (i32, i32) {
    %c0_i32 = arith.constant 0 : i32
    return %arg0, %arg1 : i32, i32
  }
}

</mosaic_0001>

<llo_original>
// kernel: tpu_custom_call.1
$region0: #{tpu_custom_call.1}
  #allocation0 [shape = 'u32[]', space=smem, size = 0x4, offset = 0x4, fixed_abs, tag = 'smem constant byte address 0x4 - core index']
  #allocation1 [shape = 'u32[144,128]{1,0:T(1,128)}', space=vmem, size = 0x12000, scoped, tag = 'internal scratch']
  %s0 = inlined_call_operand.hbm [shape: f32[32,128], index: 0, kind: input, shape index: {}]
  %s1 = inlined_call_operand.hbm [shape: bf16[128,128], index: 1, kind: input, shape index: {}]
  %s2 = inlined_call_operand.vmem [shape: bf16[1,128], index: 2, kind: input, shape index: {}]
  %s3 = inlined_call_operand.hbm [shape: bf16[128,128], index: 3, kind: input, shape index: {}]
  %s4 = inlined_call_operand.vmem [shape: bf16[1,128], index: 4, kind: input, shape index: {}]
  %s5 = inlined_call_operand.hbm [shape: bf16[128,128], index: 5, kind: input, shape index: {}]
  %s6 = inlined_call_operand.vmem [shape: bf16[1,128], index: 6, kind: input, shape index: {}]
  %s7 = inlined_call_operand.hbm [shape: f32[32,128], index: 7, kind: output, shape index: {}]
  %s8 = sld [smem:[#allocation0]]
  $region77: #{tpu_custom_call.1} parent=0
    _
  %s10 = ssub.s32 1, %s8
  %s11 = scalar_select 0, %s10, %s8
  $region1: #{tpu_custom_call.1} parent=0
    #allocation2 [shape = 'u8[16384]{0}', space=vmem, size = 0x4000, scoped, tag = 'input window, operand 0']
    #allocation3 [shape = 's32[2]{0}', space=sflag, size = 0x8, scoped, tag = 'scoped memory for tpu_custom_call.1']
    #allocation4 [shape = 's32[2]{0}', space=sflag, size = 0x8, scoped, tag = 'scoped memory for tpu_custom_call.1']
    #allocation5 [shape = 'u8[32768]{0}', space=vmem, size = 0x8000, scoped, tag = 'input window, operand 1, single buffered']
    #allocation6 [shape = 's32[1]{0}', space=sflag, size = 0x4, scoped, tag = 'scoped memory for tpu_custom_call.1']
    #allocation7 [shape = 'u8[32768]{0}', space=vmem, size = 0x8000, scoped, tag = 'input window, operand 3, single buffered']
    #allocation8 [shape = 'u8[32768]{0}', space=vmem, size = 0x8000, scoped, tag = 'input window, operand 5, single buffered']
    #allocation9 [shape = 's32[1]{0}', space=sflag, size = 0x4, scoped, tag = 'scoped memory for tpu_custom_call.1']
    #allocation10 [shape = 'u8[16384]{0}', space=vmem, size = 0x4000, scoped, tag = 'output window, operand 0']
    %12 = vsyncpa [#allocation3], 0
    %s13 = scalar_lea.sflag [#allocation3], 1
    %14 = vsyncpa %s13, 0
    %15 = vsyncpa [#allocation6], 0
    %16 = vsyncpa [#allocation9], 0
    %17 = vsyncpa [#allocation4], 0
    %s18 = scalar_lea.sflag [#allocation4], 1
    %19 = vsyncpa %s18, 0
    loop: start=0, step=1, limit=4
    $region2: #{tpu_custom_call.1} parent=1 // loop_pre_header
      _
    $region3: #{tpu_custom_call.1} parent=1 // loop_header
      %s21 = sphi 0, %s25
      %p22 = scmp.ge.s32.totalorder %s21, 4
      %s31 = sphi 0, %s33
      %s34 = sphi 0, %s31
      %s35 = sphi 0, %s34
      %s51 = sphi 0, %s35
      %s55 = sphi 0, %s55
      %s57 = sphi 0, %s55
      %s58 = sphi 0, %s57
      %s72 = sphi 0, %s58
      %s76 = sphi 0, %s76
      %s78 = sphi 0, %s76
      %s79 = sphi 0, %s78
      %s93 = sphi 0, %s79
      %s97 = sphi 0, %s97
      %s99 = sphi 0, %s97
      %s100 = sphi 0, %s99
      %s114 = sphi 0, %s100
      %s118 = sphi 0, %s118
      %s120 = sphi 0, %s118
      %s121 = sphi 0, %s120
      %s135 = sphi 0, %s121
      %s139 = sphi 0, %s139
      %s141 = sphi 0, %s139
      %s142 = sphi 0, %s141
      %s156 = sphi 0, %s142
      %s160 = sphi 0, %s160
      %s162 = sphi 0, %s160
      %s163 = sphi 0, %s162
      %s177 = sphi 0, %s163
      %s183 = sphi 0, %s185
      %s186 = sphi 0, %s183
      %s187 = sphi 0, %s186
      %s203 = sphi 0, %s187
    $region4: #{tpu_custom_call.1} parent=1 // loop_header_branch
      %24 = sbr.rel (%p22) target = $region8
    $region5: #{tpu_custom_call.1} parent=1 // loop_body
      %s26 = ssub.s32 %s21, 1
      %s27 = ssub.s32 %s21, 2
      %s28 = sadd.s32 %s21, 1
      %s29 = ssub.s32 %s21, %s28
      %p30 = scmp.eq.s32.totalorder %s29, 0
      %s32 = sadd.s32 %s31, 1
      %s33 = scalar_select %p30, %s31, %s32
      %p36 = pneg %p30
      %p37 = scmp.eq.s32.totalorder %s21, 1
      %p38 = por %p36, %p37
      %p39 = scmp.ne.s32.totalorder %s31, %s34
      %p40 = scmp.eq.s32.totalorder %s21, 0
      %p41 = por %p39, %p40
      %p42 = scmp.ne.s32.totalorder %s31, %s34
      %p43 = scmp.eq.s32.totalorder %s26, 1
      %p44 = por %p42, %p43
      %p45 = scmp.ne.s32.totalorder %s34, %s35
      %p46 = scmp.eq.s32.totalorder %s26, 0
      %p47 = por %p45, %p46
      %p48 = scmp.ne.s32.totalorder %s34, %s35
      %p49 = scmp.eq.s32.totalorder %s27, 1
      %p50 = por %p48, %p49
      %p52 = scmp.ne.s32.totalorder %s35, %s51
      %p53 = scmp.eq.s32.totalorder %s27, 0
      %p54 = por %p52, %p53
      %s56 = sadd.s32 %s55, 1
      %p59 = scmp.eq.s32.totalorder %s21, 1
      %p60 = scmp.ne.s32.totalorder %s55, %s57
      %p61 = scmp.eq.s32.totalorder %s21, 0
      %p62 = por %p60, %p61
      %p63 = scmp.ne.s32.totalorder %s55, %s57
      %p64 = scmp.eq.s32.totalorder %s26, 1
      %p65 = por %p63, %p64
      %p66 = scmp.ne.s32.totalorder %s57, %s58
      %p67 = scmp.eq.s32.totalorder %s26, 0
      %p68 = por %p66, %p67
      %p69 = scmp.ne.s32.totalorder %s57, %s58
      %p70 = scmp.eq.s32.totalorder %s27, 1
      %p71 = por %p69, %p70
      %p73 = scmp.ne.s32.totalorder %s58, %s72
      %p74 = scmp.eq.s32.totalorder %s27, 0
      %p75 = por %p73, %p74
      %s77 = sadd.s32 %s76, 1
      %p80 = scmp.eq.s32.totalorder %s21, 1
      %p81 = scmp.ne.s32.totalorder %s76, %s78
      %p82 = scmp.eq.s32.totalorder %s21, 0
      %p83 = por %p81, %p82
      %p84 = scmp.ne.s32.totalorder %s76, %s78
      %p85 = scmp.eq.s32.totalorder %s26, 1
      %p86 = por %p84, %p85
      %p87 = scmp.ne.s32.totalorder %s78, %s79
      %p88 = scmp.eq.s32.totalorder %s26, 0
      %p89 = por %p87, %p88
      %p90 = scmp.ne.s32.totalorder %s78, %s79
      %p91 = scmp.eq.s32.totalorder %s27, 1
      %p92 = por %p90, %p91
      %p94 = scmp.ne.s32.totalorder %s79, %s93
      %p95 = scmp.eq.s32.totalorder %s27, 0
      %p96 = por %p94, %p95
      %s98 = sadd.s32 %s97, 1
      %p101 = scmp.eq.s32.totalorder %s21, 1
      %p102 = scmp.ne.s32.totalorder %s97, %s99
      %p103 = scmp.eq.s32.totalorder %s21, 0
      %p104 = por %p102, %p103
      %p105 = scmp.ne.s32.totalorder %s97, %s99
      %p106 = scmp.eq.s32.totalorder %s26, 1
      %p107 = por %p105, %p106
      %p108 = scmp.ne.s32.totalorder %s99, %s100
      %p109 = scmp.eq.s32.totalorder %s26, 0
      %p110 = por %p108, %p109
      %p111 = scmp.ne.s32.totalorder %s99, %s100
      %p112 = scmp.eq.s32.totalorder %s27, 1
      %p113 = por %p111, %p112
      %p115 = scmp.ne.s32.totalorder %s100, %s114
      %p116 = scmp.eq.s32.totalorder %s27, 0
      %p117 = por %p115, %p116
      %s119 = sadd.s32 %s118, 1
      %p122 = scmp.eq.s32.totalorder %s21, 1
      %p123 = scmp.ne.s32.totalorder %s118, %s120
      %p124 = scmp.eq.s32.totalorder %s21, 0
      %p125 = por %p123, %p124
      %p126 = scmp.ne.s32.totalorder %s118, %s120
      %p127 = scmp.eq.s32.totalorder %s26, 1
      %p128 = por %p126, %p127
      %p129 = scmp.ne.s32.totalorder %s120, %s121
      %p130 = scmp.eq.s32.totalorder %s26, 0
      %p131 = por %p129, %p130
      %p132 = scmp.ne.s32.totalorder %s120, %s121
      %p133 = scmp.eq.s32.totalorder %s27, 1
      %p134 = por %p132, %p133
      %p136 = scmp.ne.s32.totalorder %s121, %s135
      %p137 = scmp.eq.s32.totalorder %s27, 0
      %p138 = por %p136, %p137
      %s140 = sadd.s32 %s139, 1
      %p143 = scmp.eq.s32.totalorder %s21, 1
      %p144 = scmp.ne.s32.totalorder %s139, %s141
      %p145 = scmp.eq.s32.totalorder %s21, 0
      %p146 = por %p144, %p145
      %p147 = scmp.ne.s32.totalorder %s139, %s141
      %p148 = scmp.eq.s32.totalorder %s26, 1
      %p149 = por %p147, %p148
      %p150 = scmp.ne.s32.totalorder %s141, %s142
      %p151 = scmp.eq.s32.totalorder %s26, 0
      %p152 = por %p150, %p151
      %p153 = scmp.ne.s32.totalorder %s141, %s142
      %p154 = scmp.eq.s32.totalorder %s27, 1
      %p155 = por %p153, %p154
      %p157 = scmp.ne.s32.totalorder %s142, %s156
      %p158 = scmp.eq.s32.totalorder %s27, 0
      %p159 = por %p157, %p158
      %s161 = sadd.s32 %s160, 1
      %p164 = scmp.eq.s32.totalorder %s21, 1
      %p165 = scmp.ne.s32.totalorder %s160, %s162
      %p166 = scmp.eq.s32.totalorder %s21, 0
      %p167 = por %p165, %p166
      %p168 = scmp.ne.s32.totalorder %s160, %s162
      %p169 = scmp.eq.s32.totalorder %s26, 1
      %p170 = por %p168, %p169
      %p171 = scmp.ne.s32.totalorder %s162, %s163
      %p172 = scmp.eq.s32.totalorder %s26, 0
      %p173 = por %p171, %p172
      %p174 = scmp.ne.s32.totalorder %s162, %s163
      %p175 = scmp.eq.s32.totalorder %s27, 1
      %p176 = por %p174, %p175
      %p178 = scmp.ne.s32.totalorder %s163, %s177
      %p179 = scmp.eq.s32.totalorder %s27, 0
      %p180 = por %p178, %p179
      %s181 = ssub.s32 %s21, %s28
      %p182 = scmp.eq.s32.totalorder %s181, 0
      %s184 = sadd.s32 %s183, 1
      %s185 = scalar_select %p182, %s183, %s184
      %p188 = pneg %p182
      %p189 = scmp.eq.s32.totalorder %s21, 1
      %p190 = por %p188, %p189
      %p191 = scmp.ne.s32.totalorder %s183, %s186
      %p192 = scmp.eq.s32.totalorder %s21, 0
      %p193 = por %p191, %p192
      %p194 = scmp.ne.s32.totalorder %s183, %s186
      %p195 = scmp.eq.s32.totalorder %s26, 1
      %p196 = por %p194, %p195
      %p197 = scmp.ne.s32.totalorder %s186, %s187
      %p198 = scmp.eq.s32.totalorder %s26, 0
      %p199 = por %p197, %p198
      %p200 = scmp.ne.s32.totalorder %s186, %s187
      %p201 = scmp.eq.s32.totalorder %s27, 1
      %p202 = por %p200, %p201
      %p204 = scmp.ne.s32.totalorder %s187, %s203
      %p205 = scmp.eq.s32.totalorder %s27, 0
      %p206 = por %p204, %p205
      %p207 = scmp.le.s32.totalorder 1, %s21
      %p208 = scmp.lt.s32.totalorder %s21, 3
      %p209 = pnand %p207, %p208
      %p210 = pneg %p209
      // Predicated region
      $region9: #{tpu_custom_call.1} parent=5 // pred_check
        _
      $region10: #{tpu_custom_call.1} parent=5 // pred_check_branch
        %212 = sbr.rel (%p209) target = $region12
      $region11: #{tpu_custom_call.1} parent=5 // pred_region
        %s213 = ssub.s32 %s21, 1
        // Predicated region
        $region13: #{tpu_custom_call.1} parent=11 // pred_check
          %p214 = pneg %p68
        $region14: #{tpu_custom_call.1} parent=11 // pred_check_branch
          %216 = sbr.rel (%p214) target = $region16
        $region15: #{tpu_custom_call.1} parent=11 // pred_region
          %s218 = ssub.s32 1024, 1024
          %219 = vsyncadd [#allocation6], %s218
          %s220 = sshll.u32 [#allocation5], 4
          %s221 = int_to_ptr.vmem [resolvable:$true] %s220
          %226 = dma.hbm_to_vmem [thread:$0]  %s1, 1024, %s221, [#allocation6], 64, 64, 4
        $region16: #{tpu_custom_call.1} parent=11 // pred_fallthru
          _
        // Predicated region
        $region17: #{tpu_custom_call.1} parent=11 // pred_check
          %p227 = pneg %p89
        $region18: #{tpu_custom_call.1} parent=11 // pred_check_branch
          %229 = sbr.rel (%p227) target = $region20
        $region19: #{tpu_custom_call.1} parent=11 // pred_region
          _
        $region20: #{tpu_custom_call.1} parent=11 // pred_fallthru
          _
        // Predicated region
        $region21: #{tpu_custom_call.1} parent=11 // pred_check
          %p230 = pneg %p110
        $region22: #{tpu_custom_call.1} parent=11 // pred_check_branch
          %232 = sbr.rel (%p230) target = $region24
        $region23: #{tpu_custom_call.1} parent=11 // pred_region
          %s234 = ssub.s32 1024, 1024
          %235 = vsyncadd [#allocation6], %s234
          %s236 = sshll.u32 [#allocation7], 4
          %s237 = int_to_ptr.vmem [resolvable:$true] %s236
          %242 = dma.hbm_to_vmem [thread:$0]  %s3, 1024, %s237, [#allocation6], 64, 64, 4
        $region24: #{tpu_custom_call.1} parent=11 // pred_fallthru
          _
        // Predicated region
        $region25: #{tpu_custom_call.1} parent=11 // pred_check
          %p243 = pneg %p131
        $region26: #{tpu_custom_call.1} parent=11 // pred_check_branch
          %245 = sbr.rel (%p243) target = $region28
        $region27: #{tpu_custom_call.1} parent=11 // pred_region
          _
        $region28: #{tpu_custom_call.1} parent=11 // pred_fallthru
          _
        // Predicated region
        $region29: #{tpu_custom_call.1} parent=11 // pred_check
          %p246 = pneg %p152
        $region30: #{tpu_custom_call.1} parent=11 // pred_check_branch
          %248 = sbr.rel (%p246) target = $region32
        $region31: #{tpu_custom_call.1} parent=11 // pred_region
          %s250 = ssub.s32 1024, 1024
          %251 = vsyncadd [#allocation9], %s250
          %s252 = sshll.u32 [#allocation8], 4
          %s253 = int_to_ptr.vmem [resolvable:$true] %s252
          %258 = dma.hbm_to_vmem [thread:$0]  %s5, 1024, %s253, [#allocation9], 64, 64, 4
        $region32: #{tpu_custom_call.1} parent=11 // pred_fallthru
          _
        // Predicated region
        $region33: #{tpu_custom_call.1} parent=11 // pred_check
          %p259 = pneg %p173
        $region34: #{tpu_custom_call.1} parent=11 // pred_check_branch
          %261 = sbr.rel (%p259) target = $region36
        $region35: #{tpu_custom_call.1} parent=11 // pred_region
          _
        $region36: #{tpu_custom_call.1} parent=11 // pred_fallthru
          _
      $region12: #{tpu_custom_call.1} parent=5 // pred_fallthru
        _
      %p262 = scmp.lt.s32.totalorder %s21, 2
      // Predicated region
      $region37: #{tpu_custom_call.1} parent=5 // pred_check
        %p263 = pneg %p262
      $region38: #{tpu_custom_call.1} parent=5 // pred_check_branch
        %265 = sbr.rel (%p263) target = $region40
      $region39: #{tpu_custom_call.1} parent=5 // pred_region
        // Predicated region
        $region41: #{tpu_custom_call.1} parent=39 // pred_check
          %p266 = pneg %p41
        $region42: #{tpu_custom_call.1} parent=39 // pred_check_branch
          %268 = sbr.rel (%p266) target = $region44
        $region43: #{tpu_custom_call.1} parent=39 // pred_region
          %s269 = sand.u32 %s31, 1
          %s270 = scalar_lea.sflag [#allocation3], %s269
          %s271 = sand.u32 %s31, 1
          %s272 = smul.addr %s271, 16
          %s273 = scalar_lea.vmem [#allocation2], %s272
          %s274 = smul.u32 2, %s21
          %s276 = ssub.s32 256, 256
          %277 = vsyncadd %s270, %s276
          %s278 = smul.addr %s274, 128
          %s279 = scalar_lea.hbm %s0, %s278
          %s280 = sshll.u32 %s273, 4
          %s281 = int_to_ptr.vmem [resolvable:$true] %s280
          %286 = dma.hbm_to_vmem [thread:$0]  %s279, 256, %s281, %s270, 128, 128, 8
        $region44: #{tpu_custom_call.1} parent=39 // pred_fallthru
          _
      $region40: #{tpu_custom_call.1} parent=5 // pred_fallthru
        _
      %p287 = scmp.le.s32.totalorder 1, %s21
      %p288 = scmp.lt.s32.totalorder %s21, 3
      %p289 = pnand %p287, %p288
      %p290 = pneg %p289
      // Predicated region
      $region45: #{tpu_custom_call.1} parent=5 // pred_check
        _
      $region46: #{tpu_custom_call.1} parent=5 // pred_check_branch
        %292 = sbr.rel (%p289) target = $region48
      $region47: #{tpu_custom_call.1} parent=5 // pred_region
        %s293 = ssub.s32 %s21, 1
        %s294 = sand.u32 %s34, 1
        %s295 = scalar_lea.sflag [#allocation3], %s294
        %s296 = sand.u32 %s34, 1
        %s297 = smul.addr %s296, 16
        %s298 = scalar_lea.vmem [#allocation2], %s297
        // Predicated region
        $region49: #{tpu_custom_call.1} parent=47 // pred_check
          %p299 = pneg %p47
        $region50: #{tpu_custom_call.1} parent=47 // pred_check_branch
          %301 = sbr.rel (%p299) target = $region52
        $region51: #{tpu_custom_call.1} parent=47 // pred_region
          %302 = dma.done %s295, 256
        $region52: #{tpu_custom_call.1} parent=47 // pred_fallthru
          _
        // Predicated region
        $region53: #{tpu_custom_call.1} parent=47 // pred_check
          %p303 = pneg %p68
        $region54: #{tpu_custom_call.1} parent=47 // pred_check_branch
          %305 = sbr.rel (%p303) target = $region56
        $region55: #{tpu_custom_call.1} parent=47 // pred_region
          %306 = dma.done [#allocation6], 1024
        $region56: #{tpu_custom_call.1} parent=47 // pred_fallthru
          _
        // Predicated region
        $region57: #{tpu_custom_call.1} parent=47 // pred_check
          %p307 = pneg %p110
        $region58: #{tpu_custom_call.1} parent=47 // pred_check_branch
          %309 = sbr.rel (%p307) target = $region60
        $region59: #{tpu_custom_call.1} parent=47 // pred_region
          %310 = dma.done [#allocation6], 1024
        $region60: #{tpu_custom_call.1} parent=47 // pred_fallthru
          _
        // Predicated region
        $region61: #{tpu_custom_call.1} parent=47 // pred_check
          %p311 = pneg %p152
        $region62: #{tpu_custom_call.1} parent=47 // pred_check_branch
          %313 = sbr.rel (%p311) target = $region64
        $region63: #{tpu_custom_call.1} parent=47 // pred_region
          %314 = dma.done [#allocation9], 1024
        $region64: #{tpu_custom_call.1} parent=47 // pred_fallthru
          _
        %s315 = sand.u32 %s34, 1
        %s316 = scalar_lea.sflag [#allocation3], %s315
        %s317 = sand.u32 %s34, 1
        %s318 = smul.addr %s317, 16
        %s319 = scalar_lea.vmem [#allocation2], %s318
        %p320 = pneg %p47
        %p321 = pneg %p44
        %p322 = pneg %p68
        %p323 = pneg %p65
        %p324 = pneg %p89
        %p325 = pneg %p86
        %p326 = pneg %p110
        %p327 = pneg %p107
        %p328 = pneg %p131
        %p329 = pneg %p128
        %p330 = pneg %p152
        %p331 = pneg %p149
        %p332 = pneg %p173
        %p333 = pneg %p170
        %p334 = pneg %p199
        %p335 = pneg %p196
        %s336 = sand.u32 %s186, 1
        %s337 = scalar_lea.sflag [#allocation4], %s336
        %s338 = sand.u32 %s186, 1
        %s339 = smul.addr %s338, 16
        %s340 = scalar_lea.vmem [#allocation10], %s339
        %s341 = smul.u32 2, %s26
        %s342 = smul.u32 2, %s26
        %v344 = vld [vmem:[%s298] sm:$0xff]
        %v345 = vld [vmem:[%s298 + $0x8] sm:$0xff]
        %v346 = vpack.c.bf16 %v345, %v344
        %v347 = vld [vmem:[#allocation5] sm:$0xf]
        %v348 = vld [vmem:[#allocation5 + $0x4] sm:$0xf]
        %v349 = vld [vmem:[#allocation5 + $0x8] sm:$0xf]
        %v350 = vld [vmem:[#allocation5 + $0xc] sm:$0xf]
        %v351 = vld [vmem:[#allocation5 + $0x10] sm:$0xf]
        %v352 = vld [vmem:[#allocation5 + $0x14] sm:$0xf]
        %v353 = vld [vmem:[#allocation5 + $0x18] sm:$0xf]
        %v354 = vld [vmem:[#allocation5 + $0x1c] sm:$0xf]
        %v355 = vld [vmem:[#allocation5 + $0x20] sm:$0xf]
        %v356 = vld [vmem:[#allocation5 + $0x24] sm:$0xf]
        %v357 = vld [vmem:[#allocation5 + $0x28] sm:$0xf]
        %v358 = vld [vmem:[#allocation5 + $0x2c] sm:$0xf]
        %v359 = vld [vmem:[#allocation5 + $0x30] sm:$0xf]
        %v360 = vld [vmem:[#allocation5 + $0x34] sm:$0xf]
        %v361 = vld [vmem:[#allocation5 + $0x38] sm:$0xf]
        %v362 = vld [vmem:[#allocation5 + $0x3c] sm:$0xf]
        %v363 = vld [vmem:[%s2] sm:$0x1]
        %v364 = vunpack.c.l.bf16 %v363
        %v365 = vlaneseq
        %v366 = vshrl.u32 %v365, 7
        %v367 = vsub.s32 0, %v366
        %v368 = vrot.slane %v364, %v367
        %v385 = vunpack.c.l.b16 %v347
        %v386 = vunpack.c.l.b16 %v348
        %v387 = vunpack.c.l.b16 %v349
        %v388 = vunpack.c.l.b16 %v350
        %v389 = vunpack.c.l.b16 %v351
        %v390 = vunpack.c.l.b16 %v352
        %v391 = vunpack.c.l.b16 %v353
        %v392 = vunpack.c.l.b16 %v354
        %v393 = vunpack.c.l.b16 %v355
        %v394 = vunpack.c.l.b16 %v356
        %v395 = vunpack.c.l.b16 %v357
        %v396 = vunpack.c.l.b16 %v358
        %v397 = vunpack.c.l.b16 %v359
        %v398 = vunpack.c.l.b16 %v360
        %v399 = vunpack.c.l.b16 %v361
        %v400 = vunpack.c.l.b16 %v362
        %v401 = vpack.c.b16 %v386, %v385
        %v402 = vpack.c.b16 %v388, %v387
        %v403 = vpack.c.b16 %v390, %v389
        %v404 = vpack.c.b16 %v392, %v391
        %v405 = vpack.c.b16 %v394, %v393
        %v406 = vpack.c.b16 %v396, %v395
        %v407 = vpack.c.b16 %v398, %v397
        %v408 = vpack.c.b16 %v400, %v399
        %417 = vmatprep.subr.bf16.mxu0 0
        %418 = vmatpush1.bf16.msra.mxu0 %v401
        %419 = vmatprep.subr.bf16.mxu0 0
        %420 = vmatpush1.bf16.msra.mxu0 %v402
        %421 = vmatprep.subr.bf16.mxu0 0
        %422 = vmatpush1.bf16.msra.mxu0 %v403
        %423 = vmatprep.subr.bf16.mxu0 0
        %424 = vmatpush1.bf16.msra.mxu0 %v404
        %425 = vmatprep.subr.bf16.mxu0 0
        %426 = vmatpush1.bf16.msra.mxu0 %v405
        %427 = vmatprep.subr.bf16.mxu0 0
        %428 = vmatpush1.bf16.msra.mxu0 %v406
        %429 = vmatprep.subr.bf16.mxu0 0
        %430 = vmatpush1.bf16.msra.mxu0 %v407
        %431 = vmatprep.subr.bf16.mxu0 0
        %432 = vmatpush1.bf16.msra.mxu0 %v408
        %433 = vmatprep.subr.bf16.mxu0 0
        %434 = vmatpush1.bf16.msra.mxu0 0
        %435 = vmatprep.subr.bf16.mxu0 0
        %436 = vmatpush1.bf16.msra.mxu0 0
        %437 = vmatprep.subr.bf16.mxu0 0
        %438 = vmatpush1.bf16.msra.mxu0 0
        %439 = vmatprep.subr.bf16.mxu0 0
        %440 = vmatpush1.bf16.msra.mxu0 0
        %441 = vmatprep.subr.bf16.mxu0 0
        %442 = vmatpush1.bf16.msra.mxu0 0
        %443 = vmatprep.subr.bf16.mxu0 0
        %444 = vmatpush1.bf16.msra.mxu0 0
        %445 = vmatprep.subr.bf16.mxu0 0
        %446 = vmatpush1.bf16.msra.mxu0 0
        %447 = vmatprep.subr.bf16.mxu0 0
        %448 = vmatpush1.bf16.msra.mxu0 0
        %449 = vmatprep.mubr.bf16.mxu0 0
        %450 = vmatmul.mubr.bf16.gmra.mrb[0].mxu0 %v346
        %v451 = vpop.f32.mrb[0].mxu0
        %v452 = vadd.f32 %v368, %v451
        %v453 = vpop.f32.mrb[0].mxu0
        %v454 = vpop.f32.mrb[0].mxu0
        %v455 = vadd.f32 %v368, %v454
        %v456 = vpop.f32.mrb[0].mxu0
        %457 = vdwg.mxu0
        %v458 = vmax.f32 %v452, 0.0
        %v459 = vmax.f32 %v455, 0.0
        %v460 = vpack.c.bf16 %v459, %v458
        %v461 = vld [vmem:[#allocation7] sm:$0xf]
        %v462 = vld [vmem:[#allocation7 + $0x4] sm:$0xf]
        %v463 = vld [vmem:[#allocation7 + $0x8] sm:$0xf]
        %v464 = vld [vmem:[#allocation7 + $0xc] sm:$0xf]
        %v465 = vld [vmem:[#allocation7 + $0x10] sm:$0xf]
        %v466 = vld [vmem:[#allocation7 + $0x14] sm:$0xf]
        %v467 = vld [vmem:[#allocation7 + $0x18] sm:$0xf]
        %v468 = vld [vmem:[#allocation7 + $0x1c] sm:$0xf]
        %v469 = vld [vmem:[#allocation7 + $0x20] sm:$0xf]
        %v470 = vld [vmem:[#allocation7 + $0x24] sm:$0xf]
        %v471 = vld [vmem:[#allocation7 + $0x28] sm:$0xf]
        %v472 = vld [vmem:[#allocation7 + $0x2c] sm:$0xf]
        %v473 = vld [vmem:[#allocation7 + $0x30] sm:$0xf]
        %v474 = vld [vmem:[#allocation7 + $0x34] sm:$0xf]
        %v475 = vld [vmem:[#allocation7 + $0x38] sm:$0xf]
        %v476 = vld [vmem:[#allocation7 + $0x3c] sm:$0xf]
        %v477 = vld [vmem:[%s4] sm:$0x1]
        %v478 = vunpack.c.l.bf16 %v477
        %v479 = vlaneseq
        %v480 = vshrl.u32 %v479, 7
        %v481 = vsub.s32 0, %v480
        %v482 = vrot.slane %v478, %v481
        %v499 = vunpack.c.l.b16 %v461
        %v500 = vunpack.c.l.b16 %v462
        %v501 = vunpack.c.l.b16 %v463
        %v502 = vunpack.c.l.b16 %v464
        %v503 = vunpack.c.l.b16 %v465
        %v504 = vunpack.c.l.b16 %v466
        %v505 = vunpack.c.l.b16 %v467
        %v506 = vunpack.c.l.b16 %v468
        %v507 = vunpack.c.l.b16 %v469
        %v508 = vunpack.c.l.b16 %v470
        %v509 = vunpack.c.l.b16 %v471
        %v510 = vunpack.c.l.b16 %v472
        %v511 = vunpack.c.l.b16 %v473
        %v512 = vunpack.c.l.b16 %v474
        %v513 = vunpack.c.l.b16 %v475
        %v514 = vunpack.c.l.b16 %v476
        %v515 = vpack.c.b16 %v500, %v499
        %v516 = vpack.c.b16 %v502, %v501
        %v517 = vpack.c.b16 %v504, %v503
        %v518 = vpack.c.b16 %v506, %v505
        %v519 = vpack.c.b16 %v508, %v507
        %v520 = vpack.c.b16 %v510, %v509
        %v521 = vpack.c.b16 %v512, %v511
        %v522 = vpack.c.b16 %v514, %v513
        %531 = vmatprep.subr.bf16.mxu0 0
        %532 = vmatpush1.bf16.msra.mxu0 %v515
        %533 = vmatprep.subr.bf16.mxu0 0
        %534 = vmatpush1.bf16.msra.mxu0 %v516
        %535 = vmatprep.subr.bf16.mxu0 0
        %536 = vmatpush1.bf16.msra.mxu0 %v517
        %537 = vmatprep.subr.bf16.mxu0 0
        %538 = vmatpush1.bf16.msra.mxu0 %v518
        %539 = vmatprep.subr.bf16.mxu0 0
        %540 = vmatpush1.bf16.msra.mxu0 %v519
        %541 = vmatprep.subr.bf16.mxu0 0
        %542 = vmatpush1.bf16.msra.mxu0 %v520
        %543 = vmatprep.subr.bf16.mxu0 0
        %544 = vmatpush1.bf16.msra.mxu0 %v521
        %545 = vmatprep.subr.bf16.mxu0 0
        %546 = vmatpush1.bf16.msra.mxu0 %v522
        %547 = vmatprep.subr.bf16.mxu0 0
        %548 = vmatpush1.bf16.msra.mxu0 0
        %549 = vmatprep.subr.bf16.mxu0 0
        %550 = vmatpush1.bf16.msra.mxu0 0
        %551 = vmatprep.subr.bf16.mxu0 0
        %552 = vmatpush1.bf16.msra.mxu0 0
        %553 = vmatprep.subr.bf16.mxu0 0
        %554 = vmatpush1.bf16.msra.mxu0 0
        %555 = vmatprep.subr.bf16.mxu0 0
        %556 = vmatpush1.bf16.msra.mxu0 0
        %557 = vmatprep.subr.bf16.mxu0 0
        %558 = vmatpush1.bf16.msra.mxu0 0
        %559 = vmatprep.subr.bf16.mxu0 0
        %560 = vmatpush1.bf16.msra.mxu0 0
        %561 = vmatprep.subr.bf16.mxu0 0
        %562 = vmatpush1.bf16.msra.mxu0 0
        %563 = vmatprep.mubr.bf16.mxu0 0
        %564 = vmatmul.mubr.bf16.gmra.mrb[0].mxu0 %v460
        %v565 = vpop.f32.mrb[0].mxu0
        %v566 = vadd.f32 %v482, %v565
        %v567 = vpop.f32.mrb[0].mxu0
        %v568 = vpop.f32.mrb[0].mxu0
        %v569 = vadd.f32 %v482, %v568
        %v570 = vpop.f32.mrb[0].mxu0
        %571 = vdwg.mxu0
        %v572 = vmax.f32 %v566, 0.0
        %v573 = vmax.f32 %v569, 0.0
        %v574 = vpack.c.bf16 %v573, %v572
        %v575 = vld [vmem:[#allocation8] sm:$0xf]
        %v576 = vld [vmem:[#allocation8 + $0x4] sm:$0xf]
        %v577 = vld [vmem:[#allocation8 + $0x8] sm:$0xf]
        %v578 = vld [vmem:[#allocation8 + $0xc] sm:$0xf]
        %v579 = vld [vmem:[#allocation8 + $0x10] sm:$0xf]
        %v580 = vld [vmem:[#allocation8 + $0x14] sm:$0xf]
        %v581 = vld [vmem:[#allocation8 + $0x18] sm:$0xf]
        %v582 = vld [vmem:[#allocation8 + $0x1c] sm:$0xf]
        %v583 = vld [vmem:[#allocation8 + $0x20] sm:$0xf]
        %v584 = vld [vmem:[#allocation8 + $0x24] sm:$0xf]
        %v585 = vld [vmem:[#allocation8 + $0x28] sm:$0xf]
        %v586 = vld [vmem:[#allocation8 + $0x2c] sm:$0xf]
        %v587 = vld [vmem:[#allocation8 + $0x30] sm:$0xf]
        %v588 = vld [vmem:[#allocation8 + $0x34] sm:$0xf]
        %v589 = vld [vmem:[#allocation8 + $0x38] sm:$0xf]
        %v590 = vld [vmem:[#allocation8 + $0x3c] sm:$0xf]
        %v591 = vld [vmem:[%s6] sm:$0x1]
        %v592 = vunpack.c.l.bf16 %v591
        %v593 = vlaneseq
        %v594 = vshrl.u32 %v593, 7
        %v595 = vsub.s32 0, %v594
        %v596 = vrot.slane %v592, %v595
        %v613 = vunpack.c.l.b16 %v575
        %v614 = vunpack.c.l.b16 %v576
        %v615 = vunpack.c.l.b16 %v577
        %v616 = vunpack.c.l.b16 %v578
        %v617 = vunpack.c.l.b16 %v579
        %v618 = vunpack.c.l.b16 %v580
        %v619 = vunpack.c.l.b16 %v581
        %v620 = vunpack.c.l.b16 %v582
        %v621 = vunpack.c.l.b16 %v583
        %v622 = vunpack.c.l.b16 %v584
        %v623 = vunpack.c.l.b16 %v585
        %v624 = vunpack.c.l.b16 %v586
        %v625 = vunpack.c.l.b16 %v587
        %v626 = vunpack.c.l.b16 %v588
        %v627 = vunpack.c.l.b16 %v589
        %v628 = vunpack.c.l.b16 %v590
        %v629 = vpack.c.b16 %v614, %v613
        %v630 = vpack.c.b16 %v616, %v615
        %v631 = vpack.c.b16 %v618, %v617
        %v632 = vpack.c.b16 %v620, %v619
        %v633 = vpack.c.b16 %v622, %v621
        %v634 = vpack.c.b16 %v624, %v623
        %v635 = vpack.c.b16 %v626, %v625
        %v636 = vpack.c.b16 %v628, %v627
        %645 = vmatprep.subr.bf16.mxu0 0
        %646 = vmatpush1.bf16.msra.mxu0 %v629
        %647 = vmatprep.subr.bf16.mxu0 0
        %648 = vmatpush1.bf16.msra.mxu0 %v630
        %649 = vmatprep.subr.bf16.mxu0 0
        %650 = vmatpush1.bf16.msra.mxu0 %v631
        %651 = vmatprep.subr.bf16.mxu0 0
        %652 = vmatpush1.bf16.msra.mxu0 %v632
        %653 = vmatprep.subr.bf16.mxu0 0
        %654 = vmatpush1.bf16.msra.mxu0 %v633
        %655 = vmatprep.subr.bf16.mxu0 0
        %656 = vmatpush1.bf16.msra.mxu0 %v634
        %657 = vmatprep.subr.bf16.mxu0 0
        %658 = vmatpush1.bf16.msra.mxu0 %v635
        %659 = vmatprep.subr.bf16.mxu0 0
        %660 = vmatpush1.bf16.msra.mxu0 %v636
        %661 = vmatprep.subr.bf16.mxu0 0
        %662 = vmatpush1.bf16.msra.mxu0 0
        %663 = vmatprep.subr.bf16.mxu0 0
        %664 = vmatpush1.bf16.msra.mxu0 0
        %665 = vmatprep.subr.bf16.mxu0 0
        %666 = vmatpush1.bf16.msra.mxu0 0
        %667 = vmatprep.subr.bf16.mxu0 0
        %668 = vmatpush1.bf16.msra.mxu0 0
        %669 = vmatprep.subr.bf16.mxu0 0
        %670 = vmatpush1.bf16.msra.mxu0 0
        %671 = vmatprep.subr.bf16.mxu0 0
        %672 = vmatpush1.bf16.msra.mxu0 0
        %673 = vmatprep.subr.bf16.mxu0 0
        %674 = vmatpush1.bf16.msra.mxu0 0
        %675 = vmatprep.subr.bf16.mxu0 0
        %676 = vmatpush1.bf16.msra.mxu0 0
        %677 = vmatprep.mubr.bf16.mxu0 0
        %678 = vmatmul.mubr.bf16.gmra.mrb[0].mxu0 %v574
        %v679 = vpop.f32.mrb[0].mxu0
        %v680 = vadd.f32 %v596, %v679
        %v681 = vpop.f32.mrb[0].mxu0
        %v682 = vpop.f32.mrb[0].mxu0
        %v683 = vadd.f32 %v596, %v682
        %v684 = vpop.f32.mrb[0].mxu0
        %685 = vdwg.mxu0
        %686 = vst [vmem:[%s340] sm:$0xff] %v680
        %687 = vst [vmem:[%s340 + $0x8] sm:$0xff] %v683
        %s688 = sand.u32 %s186, 1
        %s689 = scalar_lea.sflag [#allocation4], %s688
        %s690 = sand.u32 %s186, 1
        %s691 = smul.addr %s690, 16
        %s692 = scalar_lea.vmem [#allocation10], %s691
        // Predicated region
        $region65: #{tpu_custom_call.1} parent=47 // pred_check
          %p693 = pneg %p196
        $region66: #{tpu_custom_call.1} parent=47 // pred_check_branch
          %695 = sbr.rel (%p693) target = $region68
        $region67: #{tpu_custom_call.1} parent=47 // pred_region
          %s696 = smul.u32 2, %s26
          %s698 = ssub.s32 256, 256
          %699 = vsyncadd %s689, %s698
          %s700 = smul.addr %s696, 128
          %s701 = scalar_lea.hbm %s7, %s700
          %s702 = sshll.u32 %s692, 4
          %s703 = int_to_ptr.vmem [resolvable:$true] %s702
          %708 = dma.vmem_to_hbm [thread:$0]  %s703, 256, %s701, %s689, 128, 128, 8
        $region68: #{tpu_custom_call.1} parent=47 // pred_fallthru
          _
      $region48: #{tpu_custom_call.1} parent=5 // pred_fallthru
        _
      %p709 = scmp.le.s32.totalorder 2, %s21
      // Predicated region
      $region69: #{tpu_custom_call.1} parent=5 // pred_check
        %p710 = pneg %p709
      $region70: #{tpu_custom_call.1} parent=5 // pred_check_branch
        %712 = sbr.rel (%p710) target = $region72
      $region71: #{tpu_custom_call.1} parent=5 // pred_region
        %s713 = ssub.s32 %s21, 2
        // Predicated region
        $region73: #{tpu_custom_call.1} parent=71 // pred_check
          %p714 = pneg %p202
        $region74: #{tpu_custom_call.1} parent=71 // pred_check_branch
          %716 = sbr.rel (%p714) target = $region76
        $region75: #{tpu_custom_call.1} parent=71 // pred_region
          %s717 = sand.u32 %s187, 1
          %s718 = scalar_lea.sflag [#allocation4], %s717
          %s719 = sand.u32 %s187, 1
          %s720 = smul.addr %s719, 16
          %s721 = scalar_lea.vmem [#allocation10], %s720
          %722 = dma.done %s718, 256
        $region76: #{tpu_custom_call.1} parent=71 // pred_fallthru
          _
      $region72: #{tpu_custom_call.1} parent=5 // pred_fallthru
        _
    $region6: #{tpu_custom_call.1} parent=1 // loop_footer
      %s25 = sadd.s32 1, %s21
    $region7: #{tpu_custom_call.1} parent=1 // loop_footer_branch
      %20 = sbr.rel target = $region3
    $region8: #{tpu_custom_call.1} parent=1 // loop_exit
      _
    %723 = vsyncpa [#allocation3], 1
    %s724 = scalar_lea.sflag [#allocation3], 1
    %725 = vsyncpa %s724, 1
    %726 = vsyncpa [#allocation6], 1
    %727 = vsyncpa [#allocation9], 1
    %728 = vsyncpa [#allocation4], 1
    %s729 = scalar_lea.sflag [#allocation4], 1
    %730 = vsyncpa %s729, 1

// kernel: tpu_custom_call.1
$region0: #{tpu_custom_call.1}
  #allocation0 [shape = 'u32[]', space=smem, size = 0x4, offset = 0x4, fixed_abs, tag = 'smem constant byte address 0x4 - core index']
  #allocation1 [shape = 'u32[144,128]{1,0:T(1,128)}', space=vmem, size = 0x12000, scoped, tag = 'internal scratch']
  %s0 = inlined_call_operand.hbm [shape: f32[32,128], index: 0, kind: input, shape index: {}]
  %s1 = inlined_call_operand.hbm [shape: bf16[128,128], index: 1, kind: input, shape index: {}]
  %s2 = inlined_call_operand.vmem [shape: bf16[1,128], index: 2, kind: input, shape index: {}]
  %s3 = inlined_call_operand.hbm [shape: bf16[128,128], index: 3, kind: input, shape index: {}]
  %s4 = inlined_call_operand.vmem [shape: bf16[1,128], index: 4, kind: input, shape index: {}]
  %s5 = inlined_call_operand.hbm [shape: bf16[128,128], index: 5, kind: input, shape index: {}]
  %s6 = inlined_call_operand.vmem [shape: bf16[1,128], index: 6, kind: input, shape index: {}]
  %s7 = inlined_call_operand.hbm [shape: f32[32,128], index: 7, kind: output, shape index: {}]
  %s8 = sld [smem:[#allocation0]]
  $region77: #{tpu_custom_call.1} parent=0
    _
  %s10 = ssub.s32 1, %s8
  %s11 = scalar_select 0, %s10, %s8
  $region1: #{tpu_custom_call.1} parent=0
    #allocation2 [shape = 'u8[16384]{0}', space=vmem, size = 0x4000, scoped, tag = 'input window, operand 0']
    #allocation3 [shape = 's32[2]{0}', space=sflag, size = 0x8, scoped, tag = 'scoped memory for tpu_custom_call.1']
    #allocation4 [shape = 's32[2]{0}', space=sflag, size = 0x8, scoped, tag = 'scoped memory for tpu_custom_call.1']
    #allocation5 [shape = 'u8[32768]{0}', space=vmem, size = 0x8000, scoped, tag = 'input window, operand 1, single buffered']
    #allocation6 [shape = 's32[1]{0}', space=sflag, size = 0x4, scoped, tag = 'scoped memory for tpu_custom_call.1']
    #allocation7 [shape = 'u8[32768]{0}', space=vmem, size = 0x8000, scoped, tag = 'input window, operand 3, single buffered']
    #allocation8 [shape = 'u8[32768]{0}', space=vmem, size = 0x8000, scoped, tag = 'input window, operand 5, single buffered']
    #allocation9 [shape = 's32[1]{0}', space=sflag, size = 0x4, scoped, tag = 'scoped memory for tpu_custom_call.1']
    #allocation10 [shape = 'u8[16384]{0}', space=vmem, size = 0x4000, scoped, tag = 'output window, operand 0']
    %12 = vsyncpa [#allocation3], 0
    %s13 = scalar_lea.sflag [#allocation3], 1
    %14 = vsyncpa %s13, 0
    %15 = vsyncpa [#allocation6], 0
    %16 = vsyncpa [#allocation9], 0
    %17 = vsyncpa [#allocation4], 0
    %s18 = scalar_lea.sflag [#allocation4], 1
    %19 = vsyncpa %s18, 0
    loop: start=0, step=1, limit=4
    $region2: #{tpu_custom_call.1} parent=1 // loop_pre_header
      _
    $region3: #{tpu_custom_call.1} parent=1 // loop_header
      %s21 = sphi 0, %s25
      %p22 = scmp.ge.s32.totalorder %s21, 4
      %s31 = sphi 0, %s33
      %s34 = sphi 0, %s31
      %s35 = sphi 0, %s34
      %s51 = sphi 0, %s35
      %s55 = sphi 0, %s55
      %s57 = sphi 0, %s55
      %s58 = sphi 0, %s57
      %s72 = sphi 0, %s58
      %s76 = sphi 0, %s76
      %s78 = sphi 0, %s76
      %s79 = sphi 0, %s78
      %s93 = sphi 0, %s79
      %s97 = sphi 0, %s97
      %s99 = sphi 0, %s97
      %s100 = sphi 0, %s99
      %s114 = sphi 0, %s100
      %s118 = sphi 0, %s118
      %s120 = sphi 0, %s118
      %s121 = sphi 0, %s120
      %s135 = sphi 0, %s121
      %s139 = sphi 0, %s139
      %s141 = sphi 0, %s139
      %s142 = sphi 0, %s141
      %s156 = sphi 0, %s142
      %s160 = sphi 0, %s160
      %s162 = sphi 0, %s160
      %s163 = sphi 0, %s162
      %s177 = sphi 0, %s163
      %s183 = sphi 0, %s185
      %s186 = sphi 0, %s183
      %s187 = sphi 0, %s186
      %s203 = sphi 0, %s187
    $region4: #{tpu_custom_call.1} parent=1 // loop_header_branch
      %24 = sbr.rel (%p22) target = $region8
    $region5: #{tpu_custom_call.1} parent=1 // loop_body
      %s26 = ssub.s32 %s21, 1
      %s27 = ssub.s32 %s21, 2
      %s28 = sadd.s32 %s21, 1
      %s29 = ssub.s32 %s21, %s28
      %p30 = scmp.eq.s32.totalorder %s29, 0
      %s32 = sadd.s32 %s31, 1
      %s33 = scalar_select %p30, %s31, %s32
      %p36 = pneg %p30
      %p37 = scmp.eq.s32.totalorder %s21, 1
      %p38 = por %p36, %p37
      %p39 = scmp.ne.s32.totalorder %s31, %s34
      %p40 = scmp.eq.s32.totalorder %s21, 0
      %p41 = por %p39, %p40
      %p42 = scmp.ne.s32.totalorder %s31, %s34
      %p43 = scmp.eq.s32.totalorder %s26, 1
      %p44 = por %p42, %p43
      %p45 = scmp.ne.s32.totalorder %s34, %s35
      %p46 = scmp.eq.s32.totalorder %s26, 0
      %p47 = por %p45, %p46
      %p48 = scmp.ne.s32.totalorder %s34, %s35
      %p49 = scmp.eq.s32.totalorder %s27, 1
      %p50 = por %p48, %p49
      %p52 = scmp.ne.s32.totalorder %s35, %s51
      %p53 = scmp.eq.s32.totalorder %s27, 0
      %p54 = por %p52, %p53
      %s56 = sadd.s32 %s55, 1
      %p59 = scmp.eq.s32.totalorder %s21, 1
      %p60 = scmp.ne.s32.totalorder %s55, %s57
      %p61 = scmp.eq.s32.totalorder %s21, 0
      %p62 = por %p60, %p61
      %p63 = scmp.ne.s32.totalorder %s55, %s57
      %p64 = scmp.eq.s32.totalorder %s26, 1
      %p65 = por %p63, %p64
      %p66 = scmp.ne.s32.totalorder %s57, %s58
      %p67 = scmp.eq.s32.totalorder %s26, 0
      %p68 = por %p66, %p67
      %p69 = scmp.ne.s32.totalorder %s57, %s58
      %p70 = scmp.eq.s32.totalorder %s27, 1
      %p71 = por %p69, %p70
      %p73 = scmp.ne.s32.totalorder %s58, %s72
      %p74 = scmp.eq.s32.totalorder %s27, 0
      %p75 = por %p73, %p74
      %s77 = sadd.s32 %s76, 1
      %p80 = scmp.eq.s32.totalorder %s21, 1
      %p81 = scmp.ne.s32.totalorder %s76, %s78
      %p82 = scmp.eq.s32.totalorder %s21, 0
      %p83 = por %p81, %p82
      %p84 = scmp.ne.s32.totalorder %s76, %s78
      %p85 = scmp.eq.s32.totalorder %s26, 1
      %p86 = por %p84, %p85
      %p87 = scmp.ne.s32.totalorder %s78, %s79
      %p88 = scmp.eq.s32.totalorder %s26, 0
      %p89 = por %p87, %p88
      %p90 = scmp.ne.s32.totalorder %s78, %s79
      %p91 = scmp.eq.s32.totalorder %s27, 1
      %p92 = por %p90, %p91
      %p94 = scmp.ne.s32.totalorder %s79, %s93
      %p95 = scmp.eq.s32.totalorder %s27, 0
      %p96 = por %p94, %p95
      %s98 = sadd.s32 %s97, 1
      %p101 = scmp.eq.s32.totalorder %s21, 1
      %p102 = scmp.ne.s32.totalorder %s97, %s99
      %p103 = scmp.eq.s32.totalorder %s21, 0
      %p104 = por %p102, %p103
      %p105 = scmp.ne.s32.totalorder %s97, %s99
      %p106 = scmp.eq.s32.totalorder %s26, 1
      %p107 = por %p105, %p106
      %p108 = scmp.ne.s32.totalorder %s99, %s100
      %p109 = scmp.eq.s32.totalorder %s26, 0
      %p110 = por %p108, %p109
      %p111 = scmp.ne.s32.totalorder %s99, %s100
      %p112 = scmp.eq.s32.totalorder %s27, 1
      %p113 = por %p111, %p112
      %p115 = scmp.ne.s32.totalorder %s100, %s114
      %p116 = scmp.eq.s32.totalorder %s27, 0
      %p117 = por %p115, %p116
      %s119 = sadd.s32 %s118, 1
      %p122 = scmp.eq.s32.totalorder %s21, 1
      %p123 = scmp.ne.s32.totalorder %s118, %s120
      %p124 = scmp.eq.s32.totalorder %s21, 0
      %p125 = por %p123, %p124
      %p126 = scmp.ne.s32.totalorder %s118, %s120
      %p127 = scmp.eq.s32.totalorder %s26, 1
      %p128 = por %p126, %p127
      %p129 = scmp.ne.s32.totalorder %s120, %s121
      %p130 = scmp.eq.s32.totalorder %s26, 0
      %p131 = por %p129, %p130
      %p132 = scmp.ne.s32.totalorder %s120, %s121
      %p133 = scmp.eq.s32.totalorder %s27, 1
      %p134 = por %p132, %p133
      %p136 = scmp.ne.s32.totalorder %s121, %s135
      %p137 = scmp.eq.s32.totalorder %s27, 0
      %p138 = por %p136, %p137
      %s140 = sadd.s32 %s139, 1
      %p143 = scmp.eq.s32.totalorder %s21, 1
      %p144 = scmp.ne.s32.totalorder %s139, %s141
      %p145 = scmp.eq.s32.totalorder %s21, 0
      %p146 = por %p144, %p145
      %p147 = scmp.ne.s32.totalorder %s139, %s141
      %p148 = scmp.eq.s32.totalorder %s26, 1
      %p149 = por %p147, %p148
      %p150 = scmp.ne.s32.totalorder %s141, %s142
      %p151 = scmp.eq.s32.totalorder %s26, 0
      %p152 = por %p150, %p151
      %p153 = scmp.ne.s32.totalorder %s141, %s142
      %p154 = scmp.eq.s32.totalorder %s27, 1
      %p155 = por %p153, %p154
      %p157 = scmp.ne.s32.totalorder %s142, %s156
      %p158 = scmp.eq.s32.totalorder %s27, 0
      %p159 = por %p157, %p158
      %s161 = sadd.s32 %s160, 1
      %p164 = scmp.eq.s32.totalorder %s21, 1
      %p165 = scmp.ne.s32.totalorder %s160, %s162
      %p166 = scmp.eq.s32.totalorder %s21, 0
      %p167 = por %p165, %p166
      %p168 = scmp.ne.s32.totalorder %s160, %s162
      %p169 = scmp.eq.s32.totalorder %s26, 1
      %p170 = por %p168, %p169
      %p171 = scmp.ne.s32.totalorder %s162, %s163
      %p172 = scmp.eq.s32.totalorder %s26, 0
      %p173 = por %p171, %p172
      %p174 = scmp.ne.s32.totalorder %s162, %s163
      %p175 = scmp.eq.s32.totalorder %s27, 1
      %p176 = por %p174, %p175
      %p178 = scmp.ne.s32.totalorder %s163, %s177
      %p179 = scmp.eq.s32.totalorder %s27, 0
      %p180 = por %p178, %p179
      %s181 = ssub.s32 %s21, %s28
      %p182 = scmp.eq.s32.totalorder %s181, 0
      %s184 = sadd.s32 %s183, 1
      %s185 = scalar_select %p182, %s183, %s184
      %p188 = pneg %p182
      %p189 = scmp.eq.s32.totalorder %s21, 1
      %p190 = por %p188, %p189
      %p191 = scmp.ne.s32.totalorder %s183, %s186
      %p192 = scmp.eq.s32.totalorder %s21, 0
      %p193 = por %p191, %p192
      %p194 = scmp.ne.s32.totalorder %s183, %s186
      %p195 = scmp.eq.s32.totalorder %s26, 1
      %p196 = por %p194, %p195
      %p197 = scmp.ne.s32.totalorder %s186, %s187
      %p198 = scmp.eq.s32.totalorder %s26, 0
      %p199 = por %p197, %p198
      %p200 = scmp.ne.s32.totalorder %s186, %s187
      %p201 = scmp.eq.s32.totalorder %s27, 1
      %p202 = por %p200, %p201
      %p204 = scmp.ne.s32.totalorder %s187, %s203
      %p205 = scmp.eq.s32.totalorder %s27, 0
      %p206 = por %p204, %p205
      %p207 = scmp.le.s32.totalorder 1, %s21
      %p208 = scmp.lt.s32.totalorder %s21, 3
      %p209 = pnand %p207, %p208
      %p210 = pneg %p209
      // Predicated region
      $region9: #{tpu_custom_call.1} parent=5 // pred_check
        _
      $region10: #{tpu_custom_call.1} parent=5 // pred_check_branch
        %212 = sbr.rel (%p209) target = $region12
      $region11: #{tpu_custom_call.1} parent=5 // pred_region
        %s213 = ssub.s32 %s21, 1
        // Predicated region
        $region13: #{tpu_custom_call.1} parent=11 // pred_check
          %p214 = pneg %p68
        $region14: #{tpu_custom_call.1} parent=11 // pred_check_branch
          %216 = sbr.rel (%p214) target = $region16
        $region15: #{tpu_custom_call.1} parent=11 // pred_region
          %s218 = ssub.s32 1024, 1024
          %219 = vsyncadd [#allocation6], %s218
          %s220 = sshll.u32 [#allocation5], 4
          %s221 = int_to_ptr.vmem [resolvable:$true] %s220
          %226 = dma.hbm_to_vmem [thread:$0]  %s1, 1024, %s221, [#allocation6], 64, 64, 4
        $region16: #{tpu_custom_call.1} parent=11 // pred_fallthru
          _
        // Predicated region
        $region17: #{tpu_custom_call.1} parent=11 // pred_check
          %p227 = pneg %p89
        $region18: #{tpu_custom_call.1} parent=11 // pred_check_branch
          %229 = sbr.rel (%p227) target = $region20
        $region19: #{tpu_custom_call.1} parent=11 // pred_region
          _
        $region20: #{tpu_custom_call.1} parent=11 // pred_fallthru
          _
        // Predicated region
        $region21: #{tpu_custom_call.1} parent=11 // pred_check
          %p230 = pneg %p110
        $region22: #{tpu_custom_call.1} parent=11 // pred_check_branch
          %232 = sbr.rel (%p230) target = $region24
        $region23: #{tpu_custom_call.1} parent=11 // pred_region
          %s234 = ssub.s32 1024, 1024
          %235 = vsyncadd [#allocation6], %s234
          %s236 = sshll.u32 [#allocation7], 4
          %s237 = int_to_ptr.vmem [resolvable:$true] %s236
          %242 = dma.hbm_to_vmem [thread:$0]  %s3, 1024, %s237, [#allocation6], 64, 64, 4
        $region24: #{tpu_custom_call.1} parent=11 // pred_fallthru
          _
        // Predicated region
        $region25: #{tpu_custom_call.1} parent=11 // pred_check
          %p243 = pneg %p131
        $region26: #{tpu_custom_call.1} parent=11 // pred_check_branch
          %245 = sbr.rel (%p243) target = $region28
        $region27: #{tpu_custom_call.1} parent=11 // pred_region
          _
        $region28: #{tpu_custom_call.1} parent=11 // pred_fallthru
          _
        // Predicated region
        $region29: #{tpu_custom_call.1} parent=11 // pred_check
          %p246 = pneg %p152
        $region30: #{tpu_custom_call.1} parent=11 // pred_check_branch
          %248 = sbr.rel (%p246) target = $region32
        $region31: #{tpu_custom_call.1} parent=11 // pred_region
          %s250 = ssub.s32 1024, 1024
          %251 = vsyncadd [#allocation9], %s250
          %s252 = sshll.u32 [#allocation8], 4
          %s253 = int_to_ptr.vmem [resolvable:$true] %s252
          %258 = dma.hbm_to_vmem [thread:$0]  %s5, 1024, %s253, [#allocation9], 64, 64, 4
        $region32: #{tpu_custom_call.1} parent=11 // pred_fallthru
          _
        // Predicated region
        $region33: #{tpu_custom_call.1} parent=11 // pred_check
          %p259 = pneg %p173
        $region34: #{tpu_custom_call.1} parent=11 // pred_check_branch
          %261 = sbr.rel (%p259) target = $region36
        $region35: #{tpu_custom_call.1} parent=11 // pred_region
          _
        $region36: #{tpu_custom_call.1} parent=11 // pred_fallthru
          _
      $region12: #{tpu_custom_call.1} parent=5 // pred_fallthru
        _
      %p262 = scmp.lt.s32.totalorder %s21, 2
      // Predicated region
      $region37: #{tpu_custom_call.1} parent=5 // pred_check
        %p263 = pneg %p262
      $region38: #{tpu_custom_call.1} parent=5 // pred_check_branch
        %265 = sbr.rel (%p263) target = $region40
      $region39: #{tpu_custom_call.1} parent=5 // pred_region
        // Predicated region
        $region41: #{tpu_custom_call.1} parent=39 // pred_check
          %p266 = pneg %p41
        $region42: #{tpu_custom_call.1} parent=39 // pred_check_branch
          %268 = sbr.rel (%p266) target = $region44
        $region43: #{tpu_custom_call.1} parent=39 // pred_region
          %s269 = sand.u32 %s31, 1
          %s270 = scalar_lea.sflag [#allocation3], %s269
          %s271 = sand.u32 %s31, 1
          %s272 = smul.addr %s271, 16
          %s273 = scalar_lea.vmem [#allocation2], %s272
          %s274 = smul.u32 2, %s21
          %s276 = ssub.s32 256, 256
          %277 = vsyncadd %s270, %s276
          %s278 = smul.addr %s274, 128
          %s279 = scalar_lea.hbm %s0, %s278
          %s280 = sshll.u32 %s273, 4
          %s281 = int_to_ptr.vmem [resolvable:$true] %s280
          %286 = dma.hbm_to_vmem [thread:$0]  %s279, 256, %s281, %s270, 128, 128, 8
        $region44: #{tpu_custom_call.1} parent=39 // pred_fallthru
          _
      $region40: #{tpu_custom_call.1} parent=5 // pred_fallthru
        _
      %p287 = scmp.le.s32.totalorder 1, %s21
      %p288 = scmp.lt.s32.totalorder %s21, 3
      %p289 = pnand %p287, %p288
      %p290 = pneg %p289
      // Predicated region
      $region45: #{tpu_custom_call.1} parent=5 // pred_check
        _
      $region46: #{tpu_custom_call.1} parent=5 // pred_check_branch
        %292 = sbr.rel (%p289) target = $region48
      $region47: #{tpu_custom_call.1} parent=5 // pred_region
        %s293 = ssub.s32 %s21, 1
        %s294 = sand.u32 %s34, 1
        %s295 = scalar_lea.sflag [#allocation3], %s294
        %s296 = sand.u32 %s34, 1
        %s297 = smul.addr %s296, 16
        %s298 = scalar_lea.vmem [#allocation2], %s297
        // Predicated region
        $region49: #{tpu_custom_call.1} parent=47 // pred_check
          %p299 = pneg %p47
        $region50: #{tpu_custom_call.1} parent=47 // pred_check_branch
          %301 = sbr.rel (%p299) target = $region52
        $region51: #{tpu_custom_call.1} parent=47 // pred_region
          %302 = dma.done %s295, 256
        $region52: #{tpu_custom_call.1} parent=47 // pred_fallthru
          _
        // Predicated region
        $region53: #{tpu_custom_call.1} parent=47 // pred_check
          %p303 = pneg %p68
        $region54: #{tpu_custom_call.1} parent=47 // pred_check_branch
          %305 = sbr.rel (%p303) target = $region56
        $region55: #{tpu_custom_call.1} parent=47 // pred_region
          %306 = dma.done [#allocation6], 1024
        $region56: #{tpu_custom_call.1} parent=47 // pred_fallthru
          _
        // Predicated region
        $region57: #{tpu_custom_call.1} parent=47 // pred_check
          %p307 = pneg %p110
        $region58: #{tpu_custom_call.1} parent=47 // pred_check_branch
          %309 = sbr.rel (%p307) target = $region60
        $region59: #{tpu_custom_call.1} parent=47 // pred_region
          %310 = dma.done [#allocation6], 1024
        $region60: #{tpu_custom_call.1} parent=47 // pred_fallthru
          _
        // Predicated region
        $region61: #{tpu_custom_call.1} parent=47 // pred_check
          %p311 = pneg %p152
        $region62: #{tpu_custom_call.1} parent=47 // pred_check_branch
          %313 = sbr.rel (%p311) target = $region64
        $region63: #{tpu_custom_call.1} parent=47 // pred_region
          %314 = dma.done [#allocation9], 1024
        $region64: #{tpu_custom_call.1} parent=47 // pred_fallthru
          _
        %s315 = sand.u32 %s34, 1
        %s316 = scalar_lea.sflag [#allocation3], %s315
        %s317 = sand.u32 %s34, 1
        %s318 = smul.addr %s317, 16
        %s319 = scalar_lea.vmem [#allocation2], %s318
        %p320 = pneg %p47
        %p321 = pneg %p44
        %p322 = pneg %p68
        %p323 = pneg %p65
        %p324 = pneg %p89
        %p325 = pneg %p86
        %p326 = pneg %p110
        %p327 = pneg %p107
        %p328 = pneg %p131
        %p329 = pneg %p128
        %p330 = pneg %p152
        %p331 = pneg %p149
        %p332 = pneg %p173
        %p333 = pneg %p170
        %p334 = pneg %p199
        %p335 = pneg %p196
        %s336 = sand.u32 %s186, 1
        %s337 = scalar_lea.sflag [#allocation4], %s336
        %s338 = sand.u32 %s186, 1
        %s339 = smul.addr %s338, 16
        %s340 = scalar_lea.vmem [#allocation10], %s339
        %s341 = smul.u32 2, %s26
        %s342 = smul.u32 2, %s26
        %v344 = vld [vmem:[%s298] sm:$0xff]
        %v345 = vld [vmem:[%s298 + $0x8] sm:$0xff]
        %v346 = vpack.c.bf16 %v345, %v344
        %v347 = vld [vmem:[#allocation5] sm:$0xf]
        %v348 = vld [vmem:[#allocation5 + $0x4] sm:$0xf]
        %v349 = vld [vmem:[#allocation5 + $0x8] sm:$0xf]
        %v350 = vld [vmem:[#allocation5 + $0xc] sm:$0xf]
        %v351 = vld [vmem:[#allocation5 + $0x10] sm:$0xf]
        %v352 = vld [vmem:[#allocation5 + $0x14] sm:$0xf]
        %v353 = vld [vmem:[#allocation5 + $0x18] sm:$0xf]
        %v354 = vld [vmem:[#allocation5 + $0x1c] sm:$0xf]
        %v355 = vld [vmem:[#allocation5 + $0x20] sm:$0xf]
        %v356 = vld [vmem:[#allocation5 + $0x24] sm:$0xf]
        %v357 = vld [vmem:[#allocation5 + $0x28] sm:$0xf]
        %v358 = vld [vmem:[#allocation5 + $0x2c] sm:$0xf]
        %v359 = vld [vmem:[#allocation5 + $0x30] sm:$0xf]
        %v360 = vld [vmem:[#allocation5 + $0x34] sm:$0xf]
        %v361 = vld [vmem:[#allocation5 + $0x38] sm:$0xf]
        %v362 = vld [vmem:[#allocation5 + $0x3c] sm:$0xf]
        %v363 = vld [vmem:[%s2] sm:$0x1]
        %v364 = vunpack.c.l.bf16 %v363
        %v365 = vlaneseq
        %v366 = vshrl.u32 %v365, 7
        %v367 = vsub.s32 0, %v366
        %v368 = vrot.slane %v364, %v367
        %v385 = vunpack.c.l.b16 %v347
        %v386 = vunpack.c.l.b16 %v348
        %v387 = vunpack.c.l.b16 %v349
        %v388 = vunpack.c.l.b16 %v350
        %v389 = vunpack.c.l.b16 %v351
        %v390 = vunpack.c.l.b16 %v352
        %v391 = vunpack.c.l.b16 %v353
        %v392 = vunpack.c.l.b16 %v354
        %v393 = vunpack.c.l.b16 %v355
        %v394 = vunpack.c.l.b16 %v356
        %v395 = vunpack.c.l.b16 %v357
        %v396 = vunpack.c.l.b16 %v358
        %v397 = vunpack.c.l.b16 %v359
        %v398 = vunpack.c.l.b16 %v360
        %v399 = vunpack.c.l.b16 %v361
        %v400 = vunpack.c.l.b16 %v362
        %v401 = vpack.c.b16 %v386, %v385
        %v402 = vpack.c.b16 %v388, %v387
        %v403 = vpack.c.b16 %v390, %v389
        %v404 = vpack.c.b16 %v392, %v391
        %v405 = vpack.c.b16 %v394, %v393
        %v406 = vpack.c.b16 %v396, %v395
        %v407 = vpack.c.b16 %v398, %v397
        %v408 = vpack.c.b16 %v400, %v399
        %417 = vmatprep.subr.bf16.mxu0 0
        %418 = vmatpush1.bf16.msra.mxu0 %v401
        %419 = vmatprep.subr.bf16.mxu0 0
        %420 = vmatpush1.bf16.msra.mxu0 %v402
        %421 = vmatprep.subr.bf16.mxu0 0
        %422 = vmatpush1.bf16.msra.mxu0 %v403
        %423 = vmatprep.subr.bf16.mxu0 0
        %424 = vmatpush1.bf16.msra.mxu0 %v404
        %425 = vmatprep.subr.bf16.mxu0 0
        %426 = vmatpush1.bf16.msra.mxu0 %v405
        %427 = vmatprep.subr.bf16.mxu0 0
        %428 = vmatpush1.bf16.msra.mxu0 %v406
        %429 = vmatprep.subr.bf16.mxu0 0
        %430 = vmatpush1.bf16.msra.mxu0 %v407
        %431 = vmatprep.subr.bf16.mxu0 0
        %432 = vmatpush1.bf16.msra.mxu0 %v408
        %433 = vmatprep.subr.bf16.mxu0 0
        %434 = vmatpush1.bf16.msra.mxu0 0
        %435 = vmatprep.subr.bf16.mxu0 0
        %436 = vmatpush1.bf16.msra.mxu0 0
        %437 = vmatprep.subr.bf16.mxu0 0
        %438 = vmatpush1.bf16.msra.mxu0 0
        %439 = vmatprep.subr.bf16.mxu0 0
        %440 = vmatpush1.bf16.msra.mxu0 0
        %441 = vmatprep.subr.bf16.mxu0 0
        %442 = vmatpush1.bf16.msra.mxu0 0
        %443 = vmatprep.subr.bf16.mxu0 0
        %444 = vmatpush1.bf16.msra.mxu0 0
        %445 = vmatprep.subr.bf16.mxu0 0
        %446 = vmatpush1.bf16.msra.mxu0 0
        %447 = vmatprep.subr.bf16.mxu0 0
        %448 = vmatpush1.bf16.msra.mxu0 0
        %449 = vmatprep.mubr.bf16.mxu0 0
        %450 = vmatmul.mubr.bf16.gmra.mrb[0].mxu0 %v346
        %v451 = vpop.f32.mrb[0].mxu0
        %v452 = vadd.f32 %v368, %v451
        %v453 = vpop.f32.mrb[0].mxu0
        %v454 = vpop.f32.mrb[0].mxu0
        %v455 = vadd.f32 %v368, %v454
        %v456 = vpop.f32.mrb[0].mxu0
        %457 = vdwg.mxu0
        %v458 = vmax.f32 %v452, 0.0
        %v459 = vmax.f32 %v455, 0.0
        %v460 = vpack.c.bf16 %v459, %v458
        %v461 = vld [vmem:[#allocation7] sm:$0xf]
        %v462 = vld [vmem:[#allocation7 + $0x4] sm:$0xf]
        %v463 = vld [vmem:[#allocation7 + $0x8] sm:$0xf]
        %v464 = vld [vmem:[#allocation7 + $0xc] sm:$0xf]
        %v465 = vld [vmem:[#allocation7 + $0x10] sm:$0xf]
        %v466 = vld [vmem:[#allocation7 + $0x14] sm:$0xf]
        %v467 = vld [vmem:[#allocation7 + $0x18] sm:$0xf]
        %v468 = vld [vmem:[#allocation7 + $0x1c] sm:$0xf]
        %v469 = vld [vmem:[#allocation7 + $0x20] sm:$0xf]
        %v470 = vld [vmem:[#allocation7 + $0x24] sm:$0xf]
        %v471 = vld [vmem:[#allocation7 + $0x28] sm:$0xf]
        %v472 = vld [vmem:[#allocation7 + $0x2c] sm:$0xf]
        %v473 = vld [vmem:[#allocation7 + $0x30] sm:$0xf]
        %v474 = vld [vmem:[#allocation7 + $0x34] sm:$0xf]
        %v475 = vld [vmem:[#allocation7 + $0x38] sm:$0xf]
        %v476 = vld [vmem:[#allocation7 + $0x3c] sm:$0xf]
        %v477 = vld [vmem:[%s4] sm:$0x1]
        %v478 = vunpack.c.l.bf16 %v477
        %v479 = vlaneseq
        %v480 = vshrl.u32 %v479, 7
        %v481 = vsub.s32 0, %v480
        %v482 = vrot.slane %v478, %v481
        %v499 = vunpack.c.l.b16 %v461
        %v500 = vunpack.c.l.b16 %v462
        %v501 = vunpack.c.l.b16 %v463
        %v502 = vunpack.c.l.b16 %v464
        %v503 = vunpack.c.l.b16 %v465
        %v504 = vunpack.c.l.b16 %v466
        %v505 = vunpack.c.l.b16 %v467
        %v506 = vunpack.c.l.b16 %v468
        %v507 = vunpack.c.l.b16 %v469
        %v508 = vunpack.c.l.b16 %v470
        %v509 = vunpack.c.l.b16 %v471
        %v510 = vunpack.c.l.b16 %v472
        %v511 = vunpack.c.l.b16 %v473
        %v512 = vunpack.c.l.b16 %v474
        %v513 = vunpack.c.l.b16 %v475
        %v514 = vunpack.c.l.b16 %v476
        %v515 = vpack.c.b16 %v500, %v499
        %v516 = vpack.c.b16 %v502, %v501
        %v517 = vpack.c.b16 %v504, %v503
        %v518 = vpack.c.b16 %v506, %v505
        %v519 = vpack.c.b16 %v508, %v507
        %v520 = vpack.c.b16 %v510, %v509
        %v521 = vpack.c.b16 %v512, %v511
        %v522 = vpack.c.b16 %v514, %v513
        %531 = vmatprep.subr.bf16.mxu0 0
        %532 = vmatpush1.bf16.msra.mxu0 %v515
        %533 = vmatprep.subr.bf16.mxu0 0
        %534 = vmatpush1.bf16.msra.mxu0 %v516
        %535 = vmatprep.subr.bf16.mxu0 0
        %536 = vmatpush1.bf16.msra.mxu0 %v517
        %537 = vmatprep.subr.bf16.mxu0 0
        %538 = vmatpush1.bf16.msra.mxu0 %v518
        %539 = vmatprep.subr.bf16.mxu0 0
        %540 = vmatpush1.bf16.msra.mxu0 %v519
        %541 = vmatprep.subr.bf16.mxu0 0
        %542 = vmatpush1.bf16.msra.mxu0 %v520
        %543 = vmatprep.subr.bf16.mxu0 0
        %544 = vmatpush1.bf16.msra.mxu0 %v521
        %545 = vmatprep.subr.bf16.mxu0 0
        %546 = vmatpush1.bf16.msra.mxu0 %v522
        %547 = vmatprep.subr.bf16.mxu0 0
        %548 = vmatpush1.bf16.msra.mxu0 0
        %549 = vmatprep.subr.bf16.mxu0 0
        %550 = vmatpush1.bf16.msra.mxu0 0
        %551 = vmatprep.subr.bf16.mxu0 0
        %552 = vmatpush1.bf16.msra.mxu0 0
        %553 = vmatprep.subr.bf16.mxu0 0
        %554 = vmatpush1.bf16.msra.mxu0 0
        %555 = vmatprep.subr.bf16.mxu0 0
        %556 = vmatpush1.bf16.msra.mxu0 0
        %557 = vmatprep.subr.bf16.mxu0 0
        %558 = vmatpush1.bf16.msra.mxu0 0
        %559 = vmatprep.subr.bf16.mxu0 0
        %560 = vmatpush1.bf16.msra.mxu0 0
        %561 = vmatprep.subr.bf16.mxu0 0
        %562 = vmatpush1.bf16.msra.mxu0 0
        %563 = vmatprep.mubr.bf16.mxu0 0
        %564 = vmatmul.mubr.bf16.gmra.mrb[0].mxu0 %v460
        %v565 = vpop.f32.mrb[0].mxu0
        %v566 = vadd.f32 %v482, %v565
        %v567 = vpop.f32.mrb[0].mxu0
        %v568 = vpop.f32.mrb[0].mxu0
        %v569 = vadd.f32 %v482, %v568
        %v570 = vpop.f32.mrb[0].mxu0
        %571 = vdwg.mxu0
        %v572 = vmax.f32 %v566, 0.0
        %v573 = vmax.f32 %v569, 0.0
        %v574 = vpack.c.bf16 %v573, %v572
        %v575 = vld [vmem:[#allocation8] sm:$0xf]
        %v576 = vld [vmem:[#allocation8 + $0x4] sm:$0xf]
        %v577 = vld [vmem:[#allocation8 + $0x8] sm:$0xf]
        %v578 = vld [vmem:[#allocation8 + $0xc] sm:$0xf]
        %v579 = vld [vmem:[#allocation8 + $0x10] sm:$0xf]
        %v580 = vld [vmem:[#allocation8 + $0x14] sm:$0xf]
        %v581 = vld [vmem:[#allocation8 + $0x18] sm:$0xf]
        %v582 = vld [vmem:[#allocation8 + $0x1c] sm:$0xf]
        %v583 = vld [vmem:[#allocation8 + $0x20] sm:$0xf]
        %v584 = vld [vmem:[#allocation8 + $0x24] sm:$0xf]
        %v585 = vld [vmem:[#allocation8 + $0x28] sm:$0xf]
        %v586 = vld [vmem:[#allocation8 + $0x2c] sm:$0xf]
        %v587 = vld [vmem:[#allocation8 + $0x30] sm:$0xf]
        %v588 = vld [vmem:[#allocation8 + $0x34] sm:$0xf]
        %v589 = vld [vmem:[#allocation8 + $0x38] sm:$0xf]
        %v590 = vld [vmem:[#allocation8 + $0x3c] sm:$0xf]
        %v591 = vld [vmem:[%s6] sm:$0x1]
        %v592 = vunpack.c.l.bf16 %v591
        %v593 = vlaneseq
        %v594 = vshrl.u32 %v593, 7
        %v595 = vsub.s32 0, %v594
        %v596 = vrot.slane %v592, %v595
        %v613 = vunpack.c.l.b16 %v575
        %v614 = vunpack.c.l.b16 %v576
        %v615 = vunpack.c.l.b16 %v577
        %v616 = vunpack.c.l.b16 %v578
        %v617 = vunpack.c.l.b16 %v579
        %v618 = vunpack.c.l.b16 %v580
        %v619 = vunpack.c.l.b16 %v581
        %v620 = vunpack.c.l.b16 %v582
        %v621 = vunpack.c.l.b16 %v583
        %v622 = vunpack.c.l.b16 %v584
        %v623 = vunpack.c.l.b16 %v585
        %v624 = vunpack.c.l.b16 %v586
        %v625 = vunpack.c.l.b16 %v587
        %v626 = vunpack.c.l.b16 %v588
        %v627 = vunpack.c.l.b16 %v589
        %v628 = vunpack.c.l.b16 %v590
        %v629 = vpack.c.b16 %v614, %v613
        %v630 = vpack.c.b16 %v616, %v615
        %v631 = vpack.c.b16 %v618, %v617
        %v632 = vpack.c.b16 %v620, %v619
        %v633 = vpack.c.b16 %v622, %v621
        %v634 = vpack.c.b16 %v624, %v623
        %v635 = vpack.c.b16 %v626, %v625
        %v636 = vpack.c.b16 %v628, %v627
        %645 = vmatprep.subr.bf16.mxu0 0
        %646 = vmatpush1.bf16.msra.mxu0 %v629
        %647 = vmatprep.subr.bf16.mxu0 0
        %648 = vmatpush1.bf16.msra.mxu0 %v630
        %649 = vmatprep.subr.bf16.mxu0 0
        %650 = vmatpush1.bf16.msra.mxu0 %v631
        %651 = vmatprep.subr.bf16.mxu0 0
        %652 = vmatpush1.bf16.msra.mxu0 %v632
        %653 = vmatprep.subr.bf16.mxu0 0
        %654 = vmatpush1.bf16.msra.mxu0 %v633
        %655 = vmatprep.subr.bf16.mxu0 0
        %656 = vmatpush1.bf16.msra.mxu0 %v634
        %657 = vmatprep.subr.bf16.mxu0 0
        %658 = vmatpush1.bf16.msra.mxu0 %v635
        %659 = vmatprep.subr.bf16.mxu0 0
        %660 = vmatpush1.bf16.msra.mxu0 %v636
        %661 = vmatprep.subr.bf16.mxu0 0
        %662 = vmatpush1.bf16.msra.mxu0 0
        %663 = vmatprep.subr.bf16.mxu0 0
        %664 = vmatpush1.bf16.msra.mxu0 0
        %665 = vmatprep.subr.bf16.mxu0 0
        %666 = vmatpush1.bf16.msra.mxu0 0
        %667 = vmatprep.subr.bf16.mxu0 0
        %668 = vmatpush1.bf16.msra.mxu0 0
        %669 = vmatprep.subr.bf16.mxu0 0
        %670 = vmatpush1.bf16.msra.mxu0 0
        %671 = vmatprep.subr.bf16.mxu0 0
        %672 = vmatpush1.bf16.msra.mxu0 0
        %673 = vmatprep.subr.bf16.mxu0 0
        %674 = vmatpush1.bf16.msra.mxu0 0
        %675 = vmatprep.subr.bf16.mxu0 0
        %676 = vmatpush1.bf16.msra.mxu0 0
        %677 = vmatprep.mubr.bf16.mxu0 0
        %678 = vmatmul.mubr.bf16.gmra.mrb[0].mxu0 %v574
        %v679 = vpop.f32.mrb[0].mxu0
        %v680 = vadd.f32 %v596, %v679
        %v681 = vpop.f32.mrb[0].mxu0
        %v682 = vpop.f32.mrb[0].mxu0
        %v683 = vadd.f32 %v596, %v682
        %v684 = vpop.f32.mrb[0].mxu0
        %685 = vdwg.mxu0
        %686 = vst [vmem:[%s340] sm:$0xff] %v680
        %687 = vst [vmem:[%s340 + $0x8] sm:$0xff] %v683
        %s688 = sand.u32 %s186, 1
        %s689 = scalar_lea.sflag [#allocation4], %s688
        %s690 = sand.u32 %s186, 1
        %s691 = smul.addr %s690, 16
        %s692 = scalar_lea.vmem [#allocation10], %s691
        // Predicated region
        $region65: #{tpu_custom_call.1} parent=47 // pred_check
          %p693 = pneg %p196
        $region66: #{tpu_custom_call.1} parent=47 // pred_check_branch
          %695 = sbr.rel (%p693) target = $region68
        $region67: #{tpu_custom_call.1} parent=47 // pred_region
          %s696 = smul.u32 2, %s26
          %s698 = ssub.s32 256, 256
          %699 = vsyncadd %s689, %s698
          %s700 = smul.addr %s696, 128
          %s701 = scalar_lea.hbm %s7, %s700
          %s702 = sshll.u32 %s692, 4
          %s703 = int_to_ptr.vmem [resolvable:$true] %s702
          %708 = dma.vmem_to_hbm [thread:$0]  %s703, 256, %s701, %s689, 128, 128, 8
        $region68: #{tpu_custom_call.1} parent=47 // pred_fallthru
          _
      $region48: #{tpu_custom_call.1} parent=5 // pred_fallthru
        _
      %p709 = scmp.le.s32.totalorder 2, %s21
      // Predicated region
      $region69: #{tpu_custom_call.1} parent=5 // pred_check
        %p710 = pneg %p709
      $region70: #{tpu_custom_call.1} parent=5 // pred_check_branch
        %712 = sbr.rel (%p710) target = $region72
      $region71: #{tpu_custom_call.1} parent=5 // pred_region
        %s713 = ssub.s32 %s21, 2
        // Predicated region
        $region73: #{tpu_custom_call.1} parent=71 // pred_check
          %p714 = pneg %p202
        $region74: #{tpu_custom_call.1} parent=71 // pred_check_branch
          %716 = sbr.rel (%p714) target = $region76
        $region75: #{tpu_custom_call.1} parent=71 // pred_region
          %s717 = sand.u32 %s187, 1
          %s718 = scalar_lea.sflag [#allocation4], %s717
          %s719 = sand.u32 %s187, 1
          %s720 = smul.addr %s719, 16
          %s721 = scalar_lea.vmem [#allocation10], %s720
          %722 = dma.done %s718, 256
        $region76: #{tpu_custom_call.1} parent=71 // pred_fallthru
          _
      $region72: #{tpu_custom_call.1} parent=5 // pred_fallthru
        _
    $region6: #{tpu_custom_call.1} parent=1 // loop_footer
      %s25 = sadd.s32 1, %s21
    $region7: #{tpu_custom_call.1} parent=1 // loop_footer_branch
      %20 = sbr.rel target = $region3
    $region8: #{tpu_custom_call.1} parent=1 // loop_exit
      _
    %723 = vsyncpa [#allocation3], 1
    %s724 = scalar_lea.sflag [#allocation3], 1
    %725 = vsyncpa %s724, 1
    %726 = vsyncpa [#allocation6], 1
    %727 = vsyncpa [#allocation9], 1
    %728 = vsyncpa [#allocation4], 1
    %s729 = scalar_lea.sflag [#allocation4], 1
    %730 = vsyncpa %s729, 1

// kernel: tpu_custom_call.1
$region0: #{tpu_custom_call.1}
  #allocation0 [shape = 'u32[]', space=smem, size = 0x4, offset = 0x4, fixed_abs, tag = 'smem constant byte address 0x4 - core index']
  #allocation1 [shape = 'u32[144,128]{1,0:T(1,128)}', space=vmem, size = 0x12000, scoped, tag = 'internal scratch']
  #allocation2 [shape = 'f32[16,128]{1,0:T(8,128)}', space=vmem, size = 0x2000, scoped, tag = 'scratch operand']
  %s0 = inlined_call_operand.hbm [shape: f32[32,128], index: 0, kind: input, shape index: {}]
  %s1 = inlined_call_operand.hbm [shape: bf16[128,128], index: 1, kind: input, shape index: {}]
  %s2 = inlined_call_operand.vmem [shape: bf16[1,128], index: 2, kind: input, shape index: {}]
  %s3 = inlined_call_operand.hbm [shape: bf16[32,128], index: 3, kind: output, shape index: {}]
  %s4 = sld [smem:[#allocation0]]
  $region61: #{tpu_custom_call.1} parent=0
    _
  %s6 = ssub.s32 1, %s4
  %s7 = scalar_select 0, %s6, %s4
  $region1: #{tpu_custom_call.1} parent=0
    #allocation3 [shape = 'u8[16384]{0}', space=vmem, size = 0x4000, scoped, tag = 'input window, operand 0']
    #allocation4 [shape = 's32[2]{0}', space=sflag, size = 0x8, scoped, tag = 'scoped memory for tpu_custom_call.1']
    #allocation5 [shape = 's32[2]{0}', space=sflag, size = 0x8, scoped, tag = 'scoped memory for tpu_custom_call.1']
    #allocation6 [shape = 'u8[32768]{0}', space=vmem, size = 0x8000, scoped, tag = 'input window, operand 1, single buffered']
    #allocation7 [shape = 's32[1]{0}', space=sflag, size = 0x4, scoped, tag = 'scoped memory for tpu_custom_call.1']
    #allocation8 [shape = 'u8[8192]{0}', space=vmem, size = 0x2000, scoped, tag = 'output window, operand 0']
    %8 = vsyncpa [#allocation4], 0
    %s9 = scalar_lea.sflag [#allocation4], 1
    %10 = vsyncpa %s9, 0
    %11 = vsyncpa [#allocation7], 0
    %12 = vsyncpa [#allocation5], 0
    %s13 = scalar_lea.sflag [#allocation5], 1
    %14 = vsyncpa %s13, 0
    loop: start=0, step=1, limit=4
    $region2: #{tpu_custom_call.1} parent=1 // loop_pre_header
      _
    $region3: #{tpu_custom_call.1} parent=1 // loop_header
      %s16 = sphi 0, %s20
      %p17 = scmp.ge.s32.totalorder %s16, 4
      %s23 = sphi 0, %s42
      %s24 = sphi 0, %s38
      %s25 = sphi 0, %s34
      %s26 = sphi 0, %s23
      %s27 = sphi 0, %s24
      %s28 = sphi 0, %s25
      %s29 = sphi 0, %s26
      %s30 = sphi 0, %s27
      %s31 = sphi 0, %s28
      %s47 = sphi 0, %s49
      %s50 = sphi 0, %s47
      %s51 = sphi 0, %s50
      %s67 = sphi 0, %s51
      %s75 = sphi 0, %s77
      %s78 = sphi 0, %s75
      %s79 = sphi 0, %s78
      %s95 = sphi 0, %s79
      %s101 = sphi 0, %s103
      %s104 = sphi 0, %s101
      %s105 = sphi 0, %s104
      %s121 = sphi 0, %s105
      %s129 = sphi 0, %s131
      %s132 = sphi 0, %s129
      %s133 = sphi 0, %s132
      %s149 = sphi 0, %s133
    $region4: #{tpu_custom_call.1} parent=1 // loop_header_branch
      %19 = sbr.rel (%p17) target = $region8
    $region5: #{tpu_custom_call.1} parent=1 // loop_body
      %s21 = ssub.s32 %s16, 1
      %s22 = ssub.s32 %s16, 2
      %s32 = sadd.s32 1, %s25
      %p33 = scmp.ge.s32.totalorder %s32, 1
      %s34 = scalar_select %p33, 0, %s32
      %s35 = sadd.s32 1, %s24
      %s36 = scalar_select %p33, %s35, %s24
      %p37 = scmp.ge.s32.totalorder %s36, 1
      %s38 = scalar_select %p37, 0, %s36
      %s39 = sadd.s32 1, %s23
      %s40 = scalar_select %p37, %s39, %s23
      %p41 = scmp.ge.s32.totalorder %s40, 2
      %s42 = scalar_select %p41, 0, %s40
      %s43 = ssub.s32 %s23, %s42
      %s44 = ssub.s32 %s25, %s34
      %s45 = sor.u32 %s43, %s44
      %p46 = scmp.eq.s32.totalorder %s45, 0
      %s48 = sadd.s32 %s47, 1
      %s49 = scalar_select %p46, %s47, %s48
      %p52 = pneg %p46
      %p53 = scmp.eq.s32.totalorder %s16, 1
      %p54 = por %p52, %p53
      %p55 = scmp.ne.s32.totalorder %s47, %s50
      %p56 = scmp.eq.s32.totalorder %s16, 0
      %p57 = por %p55, %p56
      %p58 = scmp.ne.s32.totalorder %s47, %s50
      %p59 = scmp.eq.s32.totalorder %s21, 1
      %p60 = por %p58, %p59
      %p61 = scmp.ne.s32.totalorder %s50, %s51
      %p62 = scmp.eq.s32.totalorder %s21, 0
      %p63 = por %p61, %p62
      %p64 = scmp.ne.s32.totalorder %s50, %s51
      %p65 = scmp.eq.s32.totalorder %s22, 1
      %p66 = por %p64, %p65
      %p68 = scmp.ne.s32.totalorder %s51, %s67
      %p69 = scmp.eq.s32.totalorder %s22, 0
      %p70 = por %p68, %p69
      %s71 = ssub.s32 %s25, %s34
      %s72 = ssub.s32 %s24, %s38
      %s73 = sor.u32 %s71, %s72
      %p74 = scmp.eq.s32.totalorder %s73, 0
      %s76 = sadd.s32 %s75, 1
      %s77 = scalar_select %p74, %s75, %s76
      %p80 = pneg %p74
      %p81 = scmp.eq.s32.totalorder %s16, 1
      %p82 = por %p80, %p81
      %p83 = scmp.ne.s32.totalorder %s75, %s78
      %p84 = scmp.eq.s32.totalorder %s16, 0
      %p85 = por %p83, %p84
      %p86 = scmp.ne.s32.totalorder %s75, %s78
      %p87 = scmp.eq.s32.totalorder %s21, 1
      %p88 = por %p86, %p87
      %p89 = scmp.ne.s32.totalorder %s78, %s79
      %p90 = scmp.eq.s32.totalorder %s21, 0
      %p91 = por %p89, %p90
      %p92 = scmp.ne.s32.totalorder %s78, %s79
      %p93 = scmp.eq.s32.totalorder %s22, 1
      %p94 = por %p92, %p93
      %p96 = scmp.ne.s32.totalorder %s79, %s95
      %p97 = scmp.eq.s32.totalorder %s22, 0
      %p98 = por %p96, %p97
      %s99 = ssub.s32 %s24, %s38
      %p100 = scmp.eq.s32.totalorder %s99, 0
      %s102 = sadd.s32 %s101, 1
      %s103 = scalar_select %p100, %s101, %s102
      %p106 = pneg %p100
      %p107 = scmp.eq.s32.totalorder %s16, 1
      %p108 = por %p106, %p107
      %p109 = scmp.ne.s32.totalorder %s101, %s104
      %p110 = scmp.eq.s32.totalorder %s16, 0
      %p111 = por %p109, %p110
      %p112 = scmp.ne.s32.totalorder %s101, %s104
      %p113 = scmp.eq.s32.totalorder %s21, 1
      %p114 = por %p112, %p113
      %p115 = scmp.ne.s32.totalorder %s104, %s105
      %p116 = scmp.eq.s32.totalorder %s21, 0
      %p117 = por %p115, %p116
      %p118 = scmp.ne.s32.totalorder %s104, %s105
      %p119 = scmp.eq.s32.totalorder %s22, 1
      %p120 = por %p118, %p119
      %p122 = scmp.ne.s32.totalorder %s105, %s121
      %p123 = scmp.eq.s32.totalorder %s22, 0
      %p124 = por %p122, %p123
      %s125 = ssub.s32 %s23, %s42
      %s126 = ssub.s32 %s24, %s38
      %s127 = sor.u32 %s125, %s126
      %p128 = scmp.eq.s32.totalorder %s127, 0
      %s130 = sadd.s32 %s129, 1
      %s131 = scalar_select %p128, %s129, %s130
      %p134 = pneg %p128
      %p135 = scmp.eq.s32.totalorder %s16, 1
      %p136 = por %p134, %p135
      %p137 = scmp.ne.s32.totalorder %s129, %s132
      %p138 = scmp.eq.s32.totalorder %s16, 0
      %p139 = por %p137, %p138
      %p140 = scmp.ne.s32.totalorder %s129, %s132
      %p141 = scmp.eq.s32.totalorder %s21, 1
      %p142 = por %p140, %p141
      %p143 = scmp.ne.s32.totalorder %s132, %s133
      %p144 = scmp.eq.s32.totalorder %s21, 0
      %p145 = por %p143, %p144
      %p146 = scmp.ne.s32.totalorder %s132, %s133
      %p147 = scmp.eq.s32.totalorder %s22, 1
      %p148 = por %p146, %p147
      %p150 = scmp.ne.s32.totalorder %s133, %s149
      %p151 = scmp.eq.s32.totalorder %s22, 0
      %p152 = por %p150, %p151
      %p153 = scmp.le.s32.totalorder 1, %s16
      %p154 = scmp.lt.s32.totalorder %s16, 3
      %p155 = pnand %p153, %p154
      %p156 = pneg %p155
      // Predicated region
      $region9: #{tpu_custom_call.1} parent=5 // pred_check
        _
      $region10: #{tpu_custom_call.1} parent=5 // pred_check_branch
        %158 = sbr.rel (%p155) target = $region12
      $region11: #{tpu_custom_call.1} parent=5 // pred_region
        %s159 = ssub.s32 %s16, 1
        // Predicated region
        $region13: #{tpu_custom_call.1} parent=11 // pred_check
          %p160 = pneg %p91
        $region14: #{tpu_custom_call.1} parent=11 // pred_check_branch
          %162 = sbr.rel (%p160) target = $region16
        $region15: #{tpu_custom_call.1} parent=11 // pred_region
          %s163 = smul.u32 16, %s28
          %s165 = ssub.s32 1024, 1024
          %166 = vsyncadd [#allocation7], %s165
          %s167 = sadd.s32 %s27, %s163
          %s168 = smul.addr %s167, 64
          %s169 = scalar_lea.hbm %s1, %s168
          %s170 = sshll.u32 [#allocation6], 4
          %s171 = int_to_ptr.vmem [resolvable:$true] %s170
          %176 = dma.hbm_to_vmem [thread:$0]  %s169, 1024, %s171, [#allocation7], 64, 64, 4
        $region16: #{tpu_custom_call.1} parent=11 // pred_fallthru
          _
        // Predicated region
        $region17: #{tpu_custom_call.1} parent=11 // pred_check
          %p177 = pneg %p117
        $region18: #{tpu_custom_call.1} parent=11 // pred_check_branch
          %179 = sbr.rel (%p177) target = $region20
        $region19: #{tpu_custom_call.1} parent=11 // pred_region
          %p180 = scmp.lt.s32.totalorder %s27, 0
          %s181 = scalar_select %p180, %s27, 0
          %s182 = scalar_lea.vmem %s2, %s181
        $region20: #{tpu_custom_call.1} parent=11 // pred_fallthru
          _
      $region12: #{tpu_custom_call.1} parent=5 // pred_fallthru
        _
      %p183 = scmp.lt.s32.totalorder %s16, 2
      // Predicated region
      $region21: #{tpu_custom_call.1} parent=5 // pred_check
        %p184 = pneg %p183
      $region22: #{tpu_custom_call.1} parent=5 // pred_check_branch
        %186 = sbr.rel (%p184) target = $region24
      $region23: #{tpu_custom_call.1} parent=5 // pred_region
        // Predicated region
        $region25: #{tpu_custom_call.1} parent=23 // pred_check
          %p187 = pneg %p57
        $region26: #{tpu_custom_call.1} parent=23 // pred_check_branch
          %189 = sbr.rel (%p187) target = $region28
        $region27: #{tpu_custom_call.1} parent=23 // pred_region
          %s190 = sand.u32 %s47, 1
          %s191 = scalar_lea.sflag [#allocation4], %s190
          %s192 = sand.u32 %s47, 1
          %s193 = smul.addr %s192, 16
          %s194 = scalar_lea.vmem [#allocation3], %s193
          %s195 = smul.u32 2, %s23
          %s197 = ssub.s32 256, 256
          %198 = vsyncadd %s191, %s197
          %s199 = sadd.s32 %s25, %s195
          %s200 = smul.addr %s199, 128
          %s201 = scalar_lea.hbm %s0, %s200
          %s202 = sshll.u32 %s194, 4
          %s203 = int_to_ptr.vmem [resolvable:$true] %s202
          %208 = dma.hbm_to_vmem [thread:$0]  %s201, 256, %s203, %s191, 128, 128, 8
        $region28: #{tpu_custom_call.1} parent=23 // pred_fallthru
          _
      $region24: #{tpu_custom_call.1} parent=5 // pred_fallthru
        _
      %p209 = scmp.le.s32.totalorder 1, %s16
      %p210 = scmp.lt.s32.totalorder %s16, 3
      %p211 = pnand %p209, %p210
      %p212 = pneg %p211
      // Predicated region
      $region29: #{tpu_custom_call.1} parent=5 // pred_check
        _
      $region30: #{tpu_custom_call.1} parent=5 // pred_check_branch
        %214 = sbr.rel (%p211) target = $region32
      $region31: #{tpu_custom_call.1} parent=5 // pred_region
        %s215 = ssub.s32 %s16, 1
        %s216 = sand.u32 %s50, 1
        %s217 = scalar_lea.sflag [#allocation4], %s216
        %s218 = sand.u32 %s50, 1
        %s219 = smul.addr %s218, 16
        %s220 = scalar_lea.vmem [#allocation3], %s219
        // Predicated region
        $region33: #{tpu_custom_call.1} parent=31 // pred_check
          %p221 = pneg %p63
        $region34: #{tpu_custom_call.1} parent=31 // pred_check_branch
          %223 = sbr.rel (%p221) target = $region36
        $region35: #{tpu_custom_call.1} parent=31 // pred_region
          %224 = dma.done %s217, 256
        $region36: #{tpu_custom_call.1} parent=31 // pred_fallthru
          _
        // Predicated region
        $region37: #{tpu_custom_call.1} parent=31 // pred_check
          %p225 = pneg %p91
        $region38: #{tpu_custom_call.1} parent=31 // pred_check_branch
          %227 = sbr.rel (%p225) target = $region40
        $region39: #{tpu_custom_call.1} parent=31 // pred_region
          %228 = dma.done [#allocation7], 1024
        $region40: #{tpu_custom_call.1} parent=31 // pred_fallthru
          _
        %s229 = sand.u32 %s50, 1
        %s230 = scalar_lea.sflag [#allocation4], %s229
        %s231 = sand.u32 %s50, 1
        %s232 = smul.addr %s231, 16
        %s233 = scalar_lea.vmem [#allocation3], %s232
        %p234 = pneg %p63
        %p235 = pneg %p60
        %p236 = pneg %p91
        %p237 = pneg %p88
        %p238 = scmp.lt.s32.totalorder %s27, 0
        %s239 = scalar_select %p238, %s27, 0
        %s240 = scalar_lea.vmem %s2, %s239
        %p241 = pneg %p117
        %p242 = pneg %p114
        %p243 = pneg %p145
        %p244 = pneg %p142
        %s245 = sand.u32 %s132, 1
        %s246 = scalar_lea.sflag [#allocation5], %s245
        %s247 = sand.u32 %s132, 1
        %s248 = smul.addr %s247, 8
        %s249 = scalar_lea.vmem [#allocation8], %s248
        %s250 = smul.u32 2, %s26
        %s251 = smul.u32 16, %s28
        %p252 = scmp.lt.s32.totalorder %s27, 0
        %s253 = scalar_select %p252, %s27, 0
        %s254 = scalar_lea.vmem %s2, %s253
        %s255 = smul.u32 2, %s26
        %p257 = scmp.eq.s32.totalorder %s28, 0
        // Predicated region
        $region41: #{tpu_custom_call.1} parent=31 // pred_check
          %p258 = pneg %p257
        $region42: #{tpu_custom_call.1} parent=31 // pred_check_branch
          %260 = sbr.rel (%p258) target = $region44
        $region43: #{tpu_custom_call.1} parent=31 // pred_region
          %261 = vst [vmem:[#allocation2] sm:$0xff] 0.0
          %262 = vst [vmem:[#allocation2 + $0x8] sm:$0xff] 0.0
        $region44: #{tpu_custom_call.1} parent=31 // pred_fallthru
          _
        %v263 = vld [vmem:[#allocation2] sm:$0xff]
        %v264 = vld [vmem:[#allocation2 + $0x8] sm:$0xff]
        %v265 = vld [vmem:[%s220] sm:$0xff]
        %v266 = vld [vmem:[%s220 + $0x8] sm:$0xff]
        %v267 = vpack.c.bf16 %v266, %v265
        %v268 = vld [vmem:[#allocation6] sm:$0xf]
        %v269 = vld [vmem:[#allocation6 + $0x4] sm:$0xf]
        %v270 = vld [vmem:[#allocation6 + $0x8] sm:$0xf]
        %v271 = vld [vmem:[#allocation6 + $0xc] sm:$0xf]
        %v272 = vld [vmem:[#allocation6 + $0x10] sm:$0xf]
        %v273 = vld [vmem:[#allocation6 + $0x14] sm:$0xf]
        %v274 = vld [vmem:[#allocation6 + $0x18] sm:$0xf]
        %v275 = vld [vmem:[#allocation6 + $0x1c] sm:$0xf]
        %v276 = vld [vmem:[#allocation6 + $0x20] sm:$0xf]
        %v277 = vld [vmem:[#allocation6 + $0x24] sm:$0xf]
        %v278 = vld [vmem:[#allocation6 + $0x28] sm:$0xf]
        %v279 = vld [vmem:[#allocation6 + $0x2c] sm:$0xf]
        %v280 = vld [vmem:[#allocation6 + $0x30] sm:$0xf]
        %v281 = vld [vmem:[#allocation6 + $0x34] sm:$0xf]
        %v282 = vld [vmem:[#allocation6 + $0x38] sm:$0xf]
        %v283 = vld [vmem:[#allocation6 + $0x3c] sm:$0xf]
        %v300 = vunpack.c.l.b16 %v268
        %v301 = vunpack.c.l.b16 %v269
        %v302 = vunpack.c.l.b16 %v270
        %v303 = vunpack.c.l.b16 %v271
        %v304 = vunpack.c.l.b16 %v272
        %v305 = vunpack.c.l.b16 %v273
        %v306 = vunpack.c.l.b16 %v274
        %v307 = vunpack.c.l.b16 %v275
        %v308 = vunpack.c.l.b16 %v276
        %v309 = vunpack.c.l.b16 %v277
        %v310 = vunpack.c.l.b16 %v278
        %v311 = vunpack.c.l.b16 %v279
        %v312 = vunpack.c.l.b16 %v280
        %v313 = vunpack.c.l.b16 %v281
        %v314 = vunpack.c.l.b16 %v282
        %v315 = vunpack.c.l.b16 %v283
        %v316 = vpack.c.b16 %v301, %v300
        %v317 = vpack.c.b16 %v303, %v302
        %v318 = vpack.c.b16 %v305, %v304
        %v319 = vpack.c.b16 %v307, %v306
        %v320 = vpack.c.b16 %v309, %v308
        %v321 = vpack.c.b16 %v311, %v310
        %v322 = vpack.c.b16 %v313, %v312
        %v323 = vpack.c.b16 %v315, %v314
        %332 = vmatprep.subr.bf16.mxu0 0
        %333 = vmatpush1.bf16.msra.mxu0 %v316
        %334 = vmatprep.subr.bf16.mxu0 0
        %335 = vmatpush1.bf16.msra.mxu0 %v317
        %336 = vmatprep.subr.bf16.mxu0 0
        %337 = vmatpush1.bf16.msra.mxu0 %v318
        %338 = vmatprep.subr.bf16.mxu0 0
        %339 = vmatpush1.bf16.msra.mxu0 %v319
        %340 = vmatprep.subr.bf16.mxu0 0
        %341 = vmatpush1.bf16.msra.mxu0 %v320
        %342 = vmatprep.subr.bf16.mxu0 0
        %343 = vmatpush1.bf16.msra.mxu0 %v321
        %344 = vmatprep.subr.bf16.mxu0 0
        %345 = vmatpush1.bf16.msra.mxu0 %v322
        %346 = vmatprep.subr.bf16.mxu0 0
        %347 = vmatpush1.bf16.msra.mxu0 %v323
        %348 = vmatprep.subr.bf16.mxu0 0
        %349 = vmatpush1.bf16.msra.mxu0 0
        %350 = vmatprep.subr.bf16.mxu0 0
        %351 = vmatpush1.bf16.msra.mxu0 0
        %352 = vmatprep.subr.bf16.mxu0 0
        %353 = vmatpush1.bf16.msra.mxu0 0
        %354 = vmatprep.subr.bf16.mxu0 0
        %355 = vmatpush1.bf16.msra.mxu0 0
        %356 = vmatprep.subr.bf16.mxu0 0
        %357 = vmatpush1.bf16.msra.mxu0 0
        %358 = vmatprep.subr.bf16.mxu0 0
        %359 = vmatpush1.bf16.msra.mxu0 0
        %360 = vmatprep.subr.bf16.mxu0 0
        %361 = vmatpush1.bf16.msra.mxu0 0
        %362 = vmatprep.subr.bf16.mxu0 0
        %363 = vmatpush1.bf16.msra.mxu0 0
        %364 = vmatprep.mubr.bf16.mxu0 0
        %365 = vmatmul.mubr.bf16.gmra.mrb[0].mxu0 %v267
        %v366 = vpop.f32.mrb[0].mxu0
        %v367 = vadd.f32 0.0, %v366
        %v368 = vpop.f32.mrb[0].mxu0
        %v369 = vpop.f32.mrb[0].mxu0
        %v370 = vadd.f32 0.0, %v369
        %v371 = vpop.f32.mrb[0].mxu0
        %372 = vdwg.mxu0
        %v373 = vadd.f32 %v263, %v367
        %v374 = vadd.f32 %v264, %v370
        %375 = vst [vmem:[#allocation2] sm:$0xff] %v373
        %376 = vst [vmem:[#allocation2 + $0x8] sm:$0xff] %v374
        // Predicated region
        $region45: #{tpu_custom_call.1} parent=31 // pred_check
          %p377 = pneg %p257
        $region46: #{tpu_custom_call.1} parent=31 // pred_check_branch
          %379 = sbr.rel (%p377) target = $region48
        $region47: #{tpu_custom_call.1} parent=31 // pred_region
          %v380 = vld [vmem:[#allocation2] sm:$0xff]
          %v381 = vld [vmem:[#allocation2 + $0x8] sm:$0xff]
          %v382 = vld [vmem:[%s254] sm:$0x1]
          %v383 = vunpack.c.l.bf16 %v382
          %v384 = vlaneseq
          %v385 = vshrl.u32 %v384, 7
          %v386 = vsub.s32 0, %v385
          %v387 = vrot.slane %v383, %v386
          %v388 = vadd.f32 %v380, %v387
          %v389 = vadd.f32 %v381, %v387
          %v390 = vmax.f32 %v388, 0.0
          %v391 = vmax.f32 %v389, 0.0
          %v392 = vpack.c.bf16 %v391, %v390
          %v394 = vunpack.c.l.b16 %v392
          %v395 = vunpack.c.h.b16 %v392
          %v396 = vpack.c.b16 %v394, %v394
          %v397 = vpack.c.b16 %v395, %v395
          %400 = vst [vmem:[%s249] sm:$0xf] %v396
          %401 = vst [vmem:[%s249 + $0x4] sm:$0xf] %v397
        $region48: #{tpu_custom_call.1} parent=31 // pred_fallthru
          _
        %s402 = sand.u32 %s132, 1
        %s403 = scalar_lea.sflag [#allocation5], %s402
        %s404 = sand.u32 %s132, 1
        %s405 = smul.addr %s404, 8
        %s406 = scalar_lea.vmem [#allocation8], %s405
        // Predicated region
        $region49: #{tpu_custom_call.1} parent=31 // pred_check
          %p407 = pneg %p142
        $region50: #{tpu_custom_call.1} parent=31 // pred_check_branch
          %409 = sbr.rel (%p407) target = $region52
        $region51: #{tpu_custom_call.1} parent=31 // pred_region
          %s410 = smul.u32 2, %s26
          %s412 = ssub.s32 128, 128
          %413 = vsyncadd %s403, %s412
          %s414 = sadd.s32 %s27, %s410
          %s415 = smul.addr %s414, 64
          %s416 = scalar_lea.hbm %s3, %s415
          %s417 = sshll.u32 %s406, 4
          %s418 = int_to_ptr.vmem [resolvable:$true] %s417
          %423 = dma.vmem_to_hbm [thread:$0]  %s418, 128, %s416, %s403, 64, 64, 4
        $region52: #{tpu_custom_call.1} parent=31 // pred_fallthru
          _
      $region32: #{tpu_custom_call.1} parent=5 // pred_fallthru
        _
      %p424 = scmp.le.s32.totalorder 2, %s16
      // Predicated region
      $region53: #{tpu_custom_call.1} parent=5 // pred_check
        %p425 = pneg %p424
      $region54: #{tpu_custom_call.1} parent=5 // pred_check_branch
        %427 = sbr.rel (%p425) target = $region56
      $region55: #{tpu_custom_call.1} parent=5 // pred_region
        %s428 = ssub.s32 %s16, 2
        // Predicated region
        $region57: #{tpu_custom_call.1} parent=55 // pred_check
          %p429 = pneg %p148
        $region58: #{tpu_custom_call.1} parent=55 // pred_check_branch
          %431 = sbr.rel (%p429) target = $region60
        $region59: #{tpu_custom_call.1} parent=55 // pred_region
          %s432 = sand.u32 %s133, 1
          %s433 = scalar_lea.sflag [#allocation5], %s432
          %s434 = sand.u32 %s133, 1
          %s435 = smul.addr %s434, 8
          %s436 = scalar_lea.vmem [#allocation8], %s435
          %437 = dma.done %s433, 128
        $region60: #{tpu_custom_call.1} parent=55 // pred_fallthru
          _
      $region56: #{tpu_custom_call.1} parent=5 // pred_fallthru
        _
    $region6: #{tpu_custom_call.1} parent=1 // loop_footer
      %s20 = sadd.s32 1, %s16
    $region7: #{tpu_custom_call.1} parent=1 // loop_footer_branch
      %15 = sbr.rel target = $region3
    $region8: #{tpu_custom_call.1} parent=1 // loop_exit
      _
    %438 = vsyncpa [#allocation4], 1
    %s439 = scalar_lea.sflag [#allocation4], 1
    %440 = vsyncpa %s439, 1
    %441 = vsyncpa [#allocation7], 1
    %442 = vsyncpa [#allocation5], 1
    %s443 = scalar_lea.sflag [#allocation5], 1
    %444 = vsyncpa %s443, 1

</llo_original>
